<compile_context>
chip_gen: v7x
topology: tpu7x:2x2x1
jax: 0.10.0
libtpu: 0.0.40
codegen_flags: <defaults>
</compile_context>

<pallas_src>
import jax
import jax.numpy as jnp
from jax import lax
from jax.experimental import pallas as pl
from jax.experimental.pallas import tpu as pltpu

K = 7          # kernel_size (module asserts 3 or 7; this implementation uses 7)
P = 3          # padding = 3 for kernel_size 7


def _round_up(v, m):
    return ((v + m - 1) // m) * m


def _largest_divisor_leq(n, cap):
    for d in range(min(cap, n), 0, -1):
        if n % d == 0:
            return d
    return 1


def _device_info():
    """(physical VMEM bytes, has 2 TensorCores per device)."""
    vmem = 64 << 20                     # conservative default (v7x per-TC)
    try:
        vmem = int(pltpu.get_tpu_info().vmem_capacity_bytes)
    except Exception:
        pass
    multi_tc = True                     # safe default: prefer even step counts
    try:
        kind = jax.devices()[0].device_kind.lower()
        multi_tc = any(t in kind for t in ("v4", "v5p", "7"))
    except Exception:
        pass
    return vmem, multi_tc


def _vmem_need(Bt, Ct, H, W, LANES, itemsize, use_mxu):
    """Rough per-grid-step VMEM footprint (double-buffered blocks + scratch)."""
    Hp8 = _round_up(H + 2 * P, 8)
    H8, W128 = _round_up(H, 8), _round_up(W, 128)
    in_blk = Bt * Ct * H8 * W128 * itemsize
    out_blk = Bt * H8 * LANES * itemsize
    pad_scr = 2 * Hp8 * LANES * 4
    red_scr = 2 * Bt * H8 * W128 * 4
    band = (2 * K * LANES * LANES * 4) if use_mxu else 0
    return 2 * in_blk + 2 * out_blk + pad_scr + red_scr + 2 * band + (2 << 20)


def _pick_bt(B, fits, multi_tc):
    divs = sorted((d for d in range(1, min(B, 8) + 1) if B % d == 0),
                  reverse=True)
    fitting = [d for d in divs if fits(d)] or [1]
    if multi_tc:
        even = [d for d in fitting if (B // d) >= 2 and (B // d) % 2 == 0]
        if even:
            return even[0]
        multi = [d for d in fitting if (B // d) >= 2]
        if multi:
            return multi[0]
    return fitting[0]


def _make_kernel(C_total, H, W, LANES, Rs, use_mxu):
    Hp = H + 2 * P
    inv_c = 1.0 / float(C_total)

    def kernel(*refs):
        if use_mxu:
            w_ref, x_ref, band_ref, o_ref, pad_ref, sum_ref, max_ref = refs
        else:
            w_ref, x_ref, o_ref, pad_ref, sum_ref, max_ref = refs
            band_ref = None

        Bt, Ct = x_ref.shape[0], x_ref.shape[1]
        c_idx = pl.program_id(1)
        last_c = pl.num_programs(1) - 1

        # ---------- init running channel sum / max (once per batch block) ----
        @pl.when(c_idx == 0)
        def _init():
            sum_ref[...] = jnp.zeros(sum_ref.shape, jnp.float32)
            max_ref[...] = jnp.full(max_ref.shape, -jnp.inf, jnp.float32)

        # ---------- channel reduction for this Ct chunk ----------------------
        chan_unroll = Ct if Ct <= 4 else 4

        def _reduce_image(n, carry):
            for r0 in range(0, H, Rs):                 # static row strips
                rs = min(Rs, H - r0)

                def _chan(c, sm):
                    s, m = sm
                    ch = x_ref[n, c, r0:r0 + rs, :].astype(jnp.float32)
                    return s + ch, jnp.maximum(m, ch)

                s, m = lax.fori_loop(
                    0, Ct, _chan,
                    (sum_ref[n, r0:r0 + rs, :], max_ref[n, r0:r0 + rs, :]),
                    unroll=chan_unroll)
                sum_ref[n, r0:r0 + rs, :] = s
                max_ref[n, r0:r0 + rs, :] = m
            return carry

        lax.fori_loop(0, Bt, _reduce_image, 0)

        # ---------- 7x7 conv (2 -> 1 ch) + sigmoid on the last C step --------
        @pl.when(c_idx == last_c)
        def _conv():
            # Zero only the border frame (once per conv phase); the interior is
            # fully overwritten for every image, so no stale data leaks into
            # the taps and the frame stays zero afterwards.
            for c in range(2):
                pad_ref[c, 0:P, :] = jnp.zeros((P, LANES), jnp.float32)
                pad_ref[c, P + H:, :] = jnp.zeros((P, LANES), jnp.float32)
                pad_ref[c, P:P + H, 0:P] = jnp.zeros((H, P), jnp.float32)
                pad_ref[c, P:P + H, P + W:] = jnp.zeros(
                    (H, LANES - P - W), jnp.float32)

            if not use_mxu:
                # 98 taps read from SMEM once per conv phase, reused for all
                # Bt images and all row strips.
                w = [w_ref[i] for i in range(2 * K * K)]

            def _conv_image(n, carry):
                # (1) place avg / max maps into the padded scratch interior
                #     (strip-wise to keep live values small).
                for r0 in range(0, H, Rs):
                    rs = min(Rs, H - r0)
                    pad_ref[0, P + r0:P + r0 + rs, P:P + W] = (
                        sum_ref[n, r0:r0 + rs, :] * inv_c)
                    pad_ref[1, P + r0:P + r0 + rs, P:P + W] = (
                        max_ref[n, r0:r0 + rs, :])

                # (2) conv + sigmoid, row-strip tiled.  Vertical taps use
                #     static sublane-offset slices of the padded scratch.
                for r0 in range(0, H, Rs):
                    rs = min(Rs, H - r0)
                    acc = jnp.zeros((rs, LANES), jnp.float32)
                    for c in range(2):
                        for ki in range(K):
                            slab = pad_ref[c, r0 + ki:r0 + ki + rs, :]
                            if use_mxu:
                                # Horizontal 7-tap pass as a banded matmul on
                                # the MXU (f32 accumulation).
                                acc = acc + jnp.dot(
                                    slab, band_ref[c * K + ki],
                                    preferred_element_type=jnp.float32)
                            else:
                                # Horizontal taps via lane rotation (XLU);
                                # wrapped lanes land in columns >= LANES - kj
                                # > W and are sliced off by the wrapper.
                                for kj in range(K):
                                    tap = slab if kj == 0 else pltpu.roll(
                                        slab, LANES - kj, axis=1)
                                    acc = acc + w[c * K * K + ki * K + kj] * tap
                    # Exact sigmoid (parity with the reference).
                    sig = 1.0 / (1.0 + jnp.exp(-acc))
                    o_ref[n, 0, r0:r0 + rs, :] = sig.astype(o_ref.dtype)
                return carry

            lax.fori_loop(0, Bt, _conv_image, 0)

    return kernel


def spatial_attention(x, weight, *, force_mxu=None):
    """x: (B, C, H, W); weight: (1, 2, K, K) conv weight (no bias)."""
    B, C, H, W = x.shape
    assert weight.shape == (1, 2, K, K), weight.shape
    Hp = H + 2 * P
    LANES = _round_up(W + 2 * P, 128)            # lane-dense padded width
    # Roll wrap-around safety: wrapped lanes must land in columns >= W that the
    # wrapper slices off.  Holds by construction; breaks if K/P change.
    assert LANES >= W + 2 * P, (LANES, W, P)

    use_mxu = (H * W >= 56 * 56) if force_mxu is None else bool(force_mxu)

    vmem, multi_tc = _device_info()
    budget = (vmem * 3) // 4                      # ~48 MiB v7x, ~96 MiB v5e/v6e

    Ct = _largest_divisor_leq(C, 32)              # channel chunk per grid step
    itemsize = x.dtype.itemsize
    fits = lambda bt: _vmem_need(bt, Ct, H, W, LANES, itemsize, use_mxu) <= budget
    Bt = _pick_bt(B, fits, multi_tc)
    Rs = H if H <= 32 else 32                     # row-strip size

    need = _vmem_need(Bt, Ct, H, W, LANES, itemsize, use_mxu)
    vmem_limit = int(max(budget, min(need + (4 << 20), vmem - (2 << 20))))

    w_flat = weight.reshape(-1).astype(jnp.float32)        # (2*K*K,) -> SMEM

    inputs = [w_flat, x]
    in_specs = [
        # Constant (un-blocked) SMEM operand: copied once, reused every step.
        pl.BlockSpec(memory_space=pltpu.MemorySpace.SMEM),
        pl.BlockSpec((Bt, Ct, H, W), lambda b, c: (b, c, 0, 0)),
    ]
    if use_mxu:
        # Banded matrices: band[c*K + ki][p, j] = w[c, ki, p - j] for
        # 0 <= p - j < K else 0, so  slab @ band == horizontal 7-tap pass.
        w2 = weight.reshape(2, K, K).astype(jnp.float32)
        d = jnp.arange(LANES)[:, None] - jnp.arange(LANES)[None, :]
        bands = jnp.where((d >= 0) & (d < K),
                          w2[:, :, jnp.clip(d, 0, K - 1)], 0.0)
        bands = bands.reshape(2 * K, LANES, LANES)
        inputs.append(bands)
        # Constant VMEM operand (same block every step -> copied once).
        in_specs.append(pl.BlockSpec((2 * K, LANES, LANES),
                                     lambda b, c: (0, 0, 0)))

    kernel = _make_kernel(C, H, W, LANES, Rs, use_mxu)

    out_padded = pl.pallas_call(
        kernel,
        out_shape=jax.ShapeDtypeStruct((B, 1, H, LANES), x.dtype),
        grid_spec=pltpu.PrefetchScalarGridSpec(
            num_scalar_prefetch=0,
            grid=(B // Bt, C // Ct),              # reduction (C) axis last
            in_specs=in_specs,
            out_specs=pl.BlockSpec((Bt, 1, H, LANES),
                                   lambda b, c: (b, 0, 0, 0)),
            scratch_shapes=[
                pltpu.VMEM((2, Hp, LANES), jnp.float32),   # padded [avg, max]
                pltpu.VMEM((Bt, H, W), jnp.float32),       # running sum
                pltpu.VMEM((Bt, H, W), jnp.float32),       # running max
            ],
        ),
        compiler_params=pltpu.CompilerParams(
            dimension_semantics=("parallel", "arbitrary"),
            vmem_limit_bytes=vmem_limit),
    )(*inputs)

    # Drop the lane padding in the wrapper (layout plumbing, not compute).
    # Columns [W, LANES) of the padded output contain junk by design.
    return out_padded[:, :, :, :W]


if __name__ == "__main__":
    key = jax.random.PRNGKey(0)
    kx, kw = jax.random.split(key)

    B, C, H, W = 2, 4, 16, 16
    x = jax.random.normal(kx, (B, C, H, W), dtype=jnp.float32)
    # Same shape as nn.Conv2d(2, 1, 7, bias=False).weight
    weight = jax.random.normal(kw, (1, 2, K, K), dtype=jnp.float32) * 0.1

    # Plain-JAX reference (high-precision conv so the reference itself is f32).
    avg_r = jnp.mean(x, axis=1, keepdims=True)
    max_r = jnp.max(x, axis=1, keepdims=True)
    cat = jnp.concatenate([avg_r, max_r], axis=1)
    conv = lax.conv_general_dilated(
        cat, weight, window_strides=(1, 1), padding=((P, P), (P, P)),
        dimension_numbers=("NCHW", "OIHW", "NCHW"),
        precision=lax.Precision.HIGHEST)
    ref = jax.nn.sigmoid(conv)

    # Default path (VPU/roll taps at this tiny spatial size).
    out = jax.block_until_ready(spatial_attention(x, weight))
    assert out.shape == (B, 1, H, W), out.shape
    assert jnp.allclose(out, ref, atol=1e-4, rtol=1e-4), \
        float(jnp.max(jnp.abs(out - ref)))

    # MXU band-matrix path (auto-selected for H*W >= 56*56); force it here so
    # it is compiled and verified too.  Slightly looser tolerance to allow for
    # MXU matmul pass precision.
    out_mxu = jax.block_until_ready(
        spatial_attention(x, weight, force_mxu=True))
    assert out_mxu.shape == (B, 1, H, W), out_mxu.shape
    assert jnp.allclose(out_mxu, ref, atol=5e-3, rtol=5e-3), \
        float(jnp.max(jnp.abs(out_mxu - ref)))

    print("KERNEL_OK")
</pallas_src>

<mosaic_0001>
module attributes {stable_mosaic.version = 11 : i64} {
  func.func @kernel(%arg0: i32, %arg1: i32, %arg2: memref<98xf32, #tpu.memory_space<smem>>, %arg3: memref<2x4x16x16xf32, #tpu.memory_space<vmem>>, %arg4: memref<2x1x16x128xf32, #tpu.memory_space<vmem>>, %arg5: memref<2x22x128xf32, #tpu.memory_space<vmem>>, %arg6: memref<2x16x16xf32, #tpu.memory_space<vmem>>, %arg7: memref<2x16x16xf32, #tpu.memory_space<vmem>>) attributes {dimension_semantics = [#tpu.dimension_semantics<parallel>, #tpu.dimension_semantics<arbitrary>], iteration_bounds = array<i64: 1, 1>, scalar_prefetch = 0 : i64, scratch_operands = 3 : i64, tpu.core_type = #tpu.core_type<tc>, window_params = [{transform_indices = @transform_0, window_bounds = array<i64: 98>}, {transform_indices = @transform_1, window_bounds = array<i64: 2, 4, 16, 16>}, {transform_indices = @transform_2, window_bounds = array<i64: 2, 1, 16, 128>}]} {
    %c0_i32 = arith.constant 0 : i32
    %0 = arith.cmpi eq, %arg1, %c0_i32 : i32
    %1 = arith.extui %0 : i1 to i32
    %c0_i32_0 = arith.constant 0 : i32
    %2 = arith.cmpi ne, %1, %c0_i32_0 : i32
    scf.if %2 {
      %cst = arith.constant 0.000000e+00 : f32
      %7 = vector.broadcast %cst : f32 to vector<2x16x16xf32>
      %c0 = arith.constant 0 : index
      %c0_5 = arith.constant 0 : index
      %c0_6 = arith.constant 0 : index
      %8 = vector.load %arg6[%c0, %c0_5, %c0_6] : memref<2x16x16xf32, #tpu.memory_space<vmem>>, vector<2x16x16xf32>
      tpu.vector_store %arg6[%c0, %c0_5, %c0_6], %7 {strides = array<i32>} : memref<2x16x16xf32, #tpu.memory_space<vmem>>, vector<2x16x16xf32>,
      %cst_7 = arith.constant 0xFF800000 : f32
      %9 = vector.broadcast %cst_7 : f32 to vector<2x16x16xf32>
      %c0_8 = arith.constant 0 : index
      %c0_9 = arith.constant 0 : index
      %c0_10 = arith.constant 0 : index
      %10 = vector.load %arg7[%c0_8, %c0_9, %c0_10] : memref<2x16x16xf32, #tpu.memory_space<vmem>>, vector<2x16x16xf32>
      tpu.vector_store %arg7[%c0_8, %c0_9, %c0_10], %9 {strides = array<i32>} : memref<2x16x16xf32, #tpu.memory_space<vmem>>, vector<2x16x16xf32>,
    } else {
    }
    %c0_i32_1 = arith.constant 0 : i32
    %c2_i32 = arith.constant 2 : i32
    %3 = arith.addi %c0_i32_1, %c2_i32 : i32
    %c1_i32 = arith.constant 1 : i32
    scf.for %arg8 = %c0_i32_1 to %3 step %c1_i32  : i32 {
      %7 = arith.index_cast %arg8 : i32 to index
      %c0 = arith.constant 0 : index
      %c0_5 = arith.constant 0 : index
      %8 = vector.load %arg6[%7, %c0, %c0_5] : memref<2x16x16xf32, #tpu.memory_space<vmem>>, vector<1x16x16xf32>
      %9 = vector.shape_cast %8 : vector<1x16x16xf32> to vector<16x16xf32>
      %10 = arith.index_cast %arg8 : i32 to index
      %c0_6 = arith.constant 0 : index
      %c0_7 = arith.constant 0 : index
      %11 = vector.load %arg7[%10, %c0_6, %c0_7] : memref<2x16x16xf32, #tpu.memory_space<vmem>>, vector<1x16x16xf32>
      %12 = vector.shape_cast %11 : vector<1x16x16xf32> to vector<16x16xf32>
      %c0_i32_8 = arith.constant 0 : i32
      %13 = arith.index_cast %arg8 : i32 to index
      %14 = arith.index_cast %c0_i32_8 : i32 to index
      %c0_9 = arith.constant 0 : index
      %c0_10 = arith.constant 0 : index
      %15 = vector.load %arg3[%13, %14, %c0_9, %c0_10] : memref<2x4x16x16xf32, #tpu.memory_space<vmem>>, vector<1x1x16x16xf32>
      %16 = vector.shape_cast %15 : vector<1x1x16x16xf32> to vector<16x16xf32>
      %17 = arith.addf %9, %16 : vector<16x16xf32>
      %18 = arith.maximumf %12, %16 : vector<16x16xf32>
      %c1_i32_11 = arith.constant 1 : i32
      %19 = arith.index_cast %arg8 : i32 to index
      %20 = arith.index_cast %c1_i32_11 : i32 to index
      %c0_12 = arith.constant 0 : index
      %c0_13 = arith.constant 0 : index
      %21 = vector.load %arg3[%19, %20, %c0_12, %c0_13] : memref<2x4x16x16xf32, #tpu.memory_space<vmem>>, vector<1x1x16x16xf32>
      %22 = vector.shape_cast %21 : vector<1x1x16x16xf32> to vector<16x16xf32>
      %23 = arith.addf %17, %22 : vector<16x16xf32>
      %24 = arith.maximumf %18, %22 : vector<16x16xf32>
      %c2_i32_14 = arith.constant 2 : i32
      %25 = arith.index_cast %arg8 : i32 to index
      %26 = arith.index_cast %c2_i32_14 : i32 to index
      %c0_15 = arith.constant 0 : index
      %c0_16 = arith.constant 0 : index
      %27 = vector.load %arg3[%25, %26, %c0_15, %c0_16] : memref<2x4x16x16xf32, #tpu.memory_space<vmem>>, vector<1x1x16x16xf32>
      %28 = vector.shape_cast %27 : vector<1x1x16x16xf32> to vector<16x16xf32>
      %29 = arith.addf %23, %28 : vector<16x16xf32>
      %30 = arith.maximumf %24, %28 : vector<16x16xf32>
      %c3_i32 = arith.constant 3 : i32
      %31 = arith.index_cast %arg8 : i32 to index
      %32 = arith.index_cast %c3_i32 : i32 to index
      %c0_17 = arith.constant 0 : index
      %c0_18 = arith.constant 0 : index
      %33 = vector.load %arg3[%31, %32, %c0_17, %c0_18] : memref<2x4x16x16xf32, #tpu.memory_space<vmem>>, vector<1x1x16x16xf32>
      %34 = vector.shape_cast %33 : vector<1x1x16x16xf32> to vector<16x16xf32>
      %35 = arith.addf %29, %34 : vector<16x16xf32>
      %36 = arith.maximumf %30, %34 : vector<16x16xf32>
      %c4_i32 = arith.constant 4 : i32
      %37 = arith.index_cast %arg8 : i32 to index
      %c0_19 = arith.constant 0 : index
      %c0_20 = arith.constant 0 : index
      %38 = vector.load %arg6[%37, %c0_19, %c0_20] : memref<2x16x16xf32, #tpu.memory_space<vmem>>, vector<1x16x16xf32>
      %39 = vector.shape_cast %38 : vector<1x16x16xf32> to vector<16x16xf32>
      %40 = vector.shape_cast %35 : vector<16x16xf32> to vector<1x16x16xf32>
      tpu.vector_store %arg6[%37, %c0_19, %c0_20], %40 {strides = array<i32>} : memref<2x16x16xf32, #tpu.memory_space<vmem>>, vector<1x16x16xf32>,
      %41 = arith.index_cast %arg8 : i32 to index
      %c0_21 = arith.constant 0 : index
      %c0_22 = arith.constant 0 : index
      %42 = vector.load %arg7[%41, %c0_21, %c0_22] : memref<2x16x16xf32, #tpu.memory_space<vmem>>, vector<1x16x16xf32>
      %43 = vector.shape_cast %42 : vector<1x16x16xf32> to vector<16x16xf32>
      %44 = vector.shape_cast %36 : vector<16x16xf32> to vector<1x16x16xf32>
      tpu.vector_store %arg7[%41, %c0_21, %c0_22], %44 {strides = array<i32>} : memref<2x16x16xf32, #tpu.memory_space<vmem>>, vector<1x16x16xf32>,
    }
    %c2_i32_2 = arith.constant 2 : i32
    %c0_i32_3 = arith.constant 0 : i32
    %4 = arith.cmpi eq, %arg1, %c0_i32_3 : i32
    %5 = arith.extui %4 : i1 to i32
    %c0_i32_4 = arith.constant 0 : i32
    %6 = arith.cmpi ne, %5, %c0_i32_4 : i32
    scf.if %6 {
      %cst = arith.constant 0.000000e+00 : f32
      %7 = vector.broadcast %cst : f32 to vector<3x128xf32>
      %c0 = arith.constant 0 : index
      %c0_5 = arith.constant 0 : index
      %c0_6 = arith.constant 0 : index
      %8 = vector.load %arg5[%c0, %c0_5, %c0_6] : memref<2x22x128xf32, #tpu.memory_space<vmem>>, vector<1x3x128xf32>
      %9 = vector.shape_cast %8 : vector<1x3x128xf32> to vector<3x128xf32>
      %10 = vector.shape_cast %7 : vector<3x128xf32> to vector<1x3x128xf32>
      tpu.vector_store %arg5[%c0, %c0_5, %c0_6], %10 {strides = array<i32>} : memref<2x22x128xf32, #tpu.memory_space<vmem>>, vector<1x3x128xf32>,
      %cst_7 = arith.constant 0.000000e+00 : f32
      %11 = vector.broadcast %cst_7 : f32 to vector<3x128xf32>
      %c0_8 = arith.constant 0 : index
      %c19 = arith.constant 19 : index
      %c0_9 = arith.constant 0 : index
      %12 = vector.load %arg5[%c0_8, %c19, %c0_9] : memref<2x22x128xf32, #tpu.memory_space<vmem>>, vector<1x3x128xf32>
      %13 = vector.shape_cast %12 : vector<1x3x128xf32> to vector<3x128xf32>
      %14 = vector.shape_cast %11 : vector<3x128xf32> to vector<1x3x128xf32>
      tpu.vector_store %arg5[%c0_8, %c19, %c0_9], %14 {strides = array<i32>} : memref<2x22x128xf32, #tpu.memory_space<vmem>>, vector<1x3x128xf32>,
      %cst_10 = arith.constant 0.000000e+00 : f32
      %15 = vector.broadcast %cst_10 : f32 to vector<16x3xf32>
      %c0_11 = arith.constant 0 : index
      %c3 = arith.constant 3 : index
      %c0_12 = arith.constant 0 : index
      %16 = vector.load %arg5[%c0_11, %c3, %c0_12] : memref<2x22x128xf32, #tpu.memory_space<vmem>>, vector<1x16x3xf32>
      %17 = vector.shape_cast %16 : vector<1x16x3xf32> to vector<16x3xf32>
      %18 = vector.shape_cast %15 : vector<16x3xf32> to vector<1x16x3xf32>
      tpu.vector_store %arg5[%c0_11, %c3, %c0_12], %18 {strides = array<i32>} : memref<2x22x128xf32, #tpu.memory_space<vmem>>, vector<1x16x3xf32>,
      %cst_13 = arith.constant 0.000000e+00 : f32
      %19 = vector.broadcast %cst_13 : f32 to vector<16x109xf32>
      %c0_14 = arith.constant 0 : index
      %c3_15 = arith.constant 3 : index
      %c19_16 = arith.constant 19 : index
      %20 = vector.load %arg5[%c0_14, %c3_15, %c19_16] : memref<2x22x128xf32, #tpu.memory_space<vmem>>, vector<1x16x109xf32>
      %21 = vector.shape_cast %20 : vector<1x16x109xf32> to vector<16x109xf32>
      %22 = vector.shape_cast %19 : vector<16x109xf32> to vector<1x16x109xf32>
      tpu.vector_store %arg5[%c0_14, %c3_15, %c19_16], %22 {strides = array<i32>} : memref<2x22x128xf32, #tpu.memory_space<vmem>>, vector<1x16x109xf32>,
      %cst_17 = arith.constant 0.000000e+00 : f32
      %23 = vector.broadcast %cst_17 : f32 to vector<3x128xf32>
      %c1 = arith.constant 1 : index
      %c0_18 = arith.constant 0 : index
      %c0_19 = arith.constant 0 : index
      %24 = vector.load %arg5[%c1, %c0_18, %c0_19] : memref<2x22x128xf32, #tpu.memory_space<vmem>>, vector<1x3x128xf32>
      %25 = vector.shape_cast %24 : vector<1x3x128xf32> to vector<3x128xf32>
      %26 = vector.shape_cast %23 : vector<3x128xf32> to vector<1x3x128xf32>
      tpu.vector_store %arg5[%c1, %c0_18, %c0_19], %26 {strides = array<i32>} : memref<2x22x128xf32, #tpu.memory_space<vmem>>, vector<1x3x128xf32>,
      %cst_20 = arith.constant 0.000000e+00 : f32
      %27 = vector.broadcast %cst_20 : f32 to vector<3x128xf32>
      %c1_21 = arith.constant 1 : index
      %c19_22 = arith.constant 19 : index
      %c0_23 = arith.constant 0 : index
      %28 = vector.load %arg5[%c1_21, %c19_22, %c0_23] : memref<2x22x128xf32, #tpu.memory_space<vmem>>, vector<1x3x128xf32>
      %29 = vector.shape_cast %28 : vector<1x3x128xf32> to vector<3x128xf32>
      %30 = vector.shape_cast %27 : vector<3x128xf32> to vector<1x3x128xf32>
      tpu.vector_store %arg5[%c1_21, %c19_22, %c0_23], %30 {strides = array<i32>} : memref<2x22x128xf32, #tpu.memory_space<vmem>>, vector<1x3x128xf32>,
      %cst_24 = arith.constant 0.000000e+00 : f32
      %31 = vector.broadcast %cst_24 : f32 to vector<16x3xf32>
      %c1_25 = arith.constant 1 : index
      %c3_26 = arith.constant 3 : index
      %c0_27 = arith.constant 0 : index
      %32 = vector.load %arg5[%c1_25, %c3_26, %c0_27] : memref<2x22x128xf32, #tpu.memory_space<vmem>>, vector<1x16x3xf32>
      %33 = vector.shape_cast %32 : vector<1x16x3xf32> to vector<16x3xf32>
      %34 = vector.shape_cast %31 : vector<16x3xf32> to vector<1x16x3xf32>
      tpu.vector_store %arg5[%c1_25, %c3_26, %c0_27], %34 {strides = array<i32>} : memref<2x22x128xf32, #tpu.memory_space<vmem>>, vector<1x16x3xf32>,
      %cst_28 = arith.constant 0.000000e+00 : f32
      %35 = vector.broadcast %cst_28 : f32 to vector<16x109xf32>
      %c1_29 = arith.constant 1 : index
      %c3_30 = arith.constant 3 : index
      %c19_31 = arith.constant 19 : index
      %36 = vector.load %arg5[%c1_29, %c3_30, %c19_31] : memref<2x22x128xf32, #tpu.memory_space<vmem>>, vector<1x16x109xf32>
      %37 = vector.shape_cast %36 : vector<1x16x109xf32> to vector<16x109xf32>
      %38 = vector.shape_cast %35 : vector<16x109xf32> to vector<1x16x109xf32>
      tpu.vector_store %arg5[%c1_29, %c3_30, %c19_31], %38 {strides = array<i32>} : memref<2x22x128xf32, #tpu.memory_space<vmem>>, vector<1x16x109xf32>,
      %c0_32 = arith.constant 0 : index
      %39 = memref.load %arg2[%c0_32] : memref<98xf32, #tpu.memory_space<smem>>
      %c1_33 = arith.constant 1 : index
      %40 = memref.load %arg2[%c1_33] : memref<98xf32, #tpu.memory_space<smem>>
      %c2 = arith.constant 2 : index
      %41 = memref.load %arg2[%c2] : memref<98xf32, #tpu.memory_space<smem>>
      %c3_34 = arith.constant 3 : index
      %42 = memref.load %arg2[%c3_34] : memref<98xf32, #tpu.memory_space<smem>>
      %c4 = arith.constant 4 : index
      %43 = memref.load %arg2[%c4] : memref<98xf32, #tpu.memory_space<smem>>
      %c5 = arith.constant 5 : index
      %44 = memref.load %arg2[%c5] : memref<98xf32, #tpu.memory_space<smem>>
      %c6 = arith.constant 6 : index
      %45 = memref.load %arg2[%c6] : memref<98xf32, #tpu.memory_space<smem>>
      %c7 = arith.constant 7 : index
      %46 = memref.load %arg2[%c7] : memref<98xf32, #tpu.memory_space<smem>>
      %c8 = arith.constant 8 : index
      %47 = memref.load %arg2[%c8] : memref<98xf32, #tpu.memory_space<smem>>
      %c9 = arith.constant 9 : index
      %48 = memref.load %arg2[%c9] : memref<98xf32, #tpu.memory_space<smem>>
      %c10 = arith.constant 10 : index
      %49 = memref.load %arg2[%c10] : memref<98xf32, #tpu.memory_space<smem>>
      %c11 = arith.constant 11 : index
      %50 = memref.load %arg2[%c11] : memref<98xf32, #tpu.memory_space<smem>>
      %c12 = arith.constant 12 : index
      %51 = memref.load %arg2[%c12] : memref<98xf32, #tpu.memory_space<smem>>
      %c13 = arith.constant 13 : index
      %52 = memref.load %arg2[%c13] : memref<98xf32, #tpu.memory_space<smem>>
      %c14 = arith.constant 14 : index
      %53 = memref.load %arg2[%c14] : memref<98xf32, #tpu.memory_space<smem>>
      %c15 = arith.constant 15 : index
      %54 = memref.load %arg2[%c15] : memref<98xf32, #tpu.memory_space<smem>>
      %c16 = arith.constant 16 : index
      %55 = memref.load %arg2[%c16] : memref<98xf32, #tpu.memory_space<smem>>
      %c17 = arith.constant 17 : index
      %56 = memref.load %arg2[%c17] : memref<98xf32, #tpu.memory_space<smem>>
      %c18 = arith.constant 18 : index
      %57 = memref.load %arg2[%c18] : memref<98xf32, #tpu.memory_space<smem>>
      %c19_35 = arith.constant 19 : index
      %58 = memref.load %arg2[%c19_35] : memref<98xf32, #tpu.memory_space<smem>>
      %c20 = arith.constant 20 : index
      %59 = memref.load %arg2[%c20] : memref<98xf32, #tpu.memory_space<smem>>
      %c21 = arith.constant 21 : index
      %60 = memref.load %arg2[%c21] : memref<98xf32, #tpu.memory_space<smem>>
      %c22 = arith.constant 22 : index
      %61 = memref.load %arg2[%c22] : memref<98xf32, #tpu.memory_space<smem>>
      %c23 = arith.constant 23 : index
      %62 = memref.load %arg2[%c23] : memref<98xf32, #tpu.memory_space<smem>>
      %c24 = arith.constant 24 : index
      %63 = memref.load %arg2[%c24] : memref<98xf32, #tpu.memory_space<smem>>
      %c25 = arith.constant 25 : index
      %64 = memref.load %arg2[%c25] : memref<98xf32, #tpu.memory_space<smem>>
      %c26 = arith.constant 26 : index
      %65 = memref.load %arg2[%c26] : memref<98xf32, #tpu.memory_space<smem>>
      %c27 = arith.constant 27 : index
      %66 = memref.load %arg2[%c27] : memref<98xf32, #tpu.memory_space<smem>>
      %c28 = arith.constant 28 : index
      %67 = memref.load %arg2[%c28] : memref<98xf32, #tpu.memory_space<smem>>
      %c29 = arith.constant 29 : index
      %68 = memref.load %arg2[%c29] : memref<98xf32, #tpu.memory_space<smem>>
      %c30 = arith.constant 30 : index
      %69 = memref.load %arg2[%c30] : memref<98xf32, #tpu.memory_space<smem>>
      %c31 = arith.constant 31 : index
      %70 = memref.load %arg2[%c31] : memref<98xf32, #tpu.memory_space<smem>>
      %c32 = arith.constant 32 : index
      %71 = memref.load %arg2[%c32] : memref<98xf32, #tpu.memory_space<smem>>
      %c33 = arith.constant 33 : index
      %72 = memref.load %arg2[%c33] : memref<98xf32, #tpu.memory_space<smem>>
      %c34 = arith.constant 34 : index
      %73 = memref.load %arg2[%c34] : memref<98xf32, #tpu.memory_space<smem>>
      %c35 = arith.constant 35 : index
      %74 = memref.load %arg2[%c35] : memref<98xf32, #tpu.memory_space<smem>>
      %c36 = arith.constant 36 : index
      %75 = memref.load %arg2[%c36] : memref<98xf32, #tpu.memory_space<smem>>
      %c37 = arith.constant 37 : index
      %76 = memref.load %arg2[%c37] : memref<98xf32, #tpu.memory_space<smem>>
      %c38 = arith.constant 38 : index
      %77 = memref.load %arg2[%c38] : memref<98xf32, #tpu.memory_space<smem>>
      %c39 = arith.constant 39 : index
      %78 = memref.load %arg2[%c39] : memref<98xf32, #tpu.memory_space<smem>>
      %c40 = arith.constant 40 : index
      %79 = memref.load %arg2[%c40] : memref<98xf32, #tpu.memory_space<smem>>
      %c41 = arith.constant 41 : index
      %80 = memref.load %arg2[%c41] : memref<98xf32, #tpu.memory_space<smem>>
      %c42 = arith.constant 42 : index
      %81 = memref.load %arg2[%c42] : memref<98xf32, #tpu.memory_space<smem>>
      %c43 = arith.constant 43 : index
      %82 = memref.load %arg2[%c43] : memref<98xf32, #tpu.memory_space<smem>>
      %c44 = arith.constant 44 : index
      %83 = memref.load %arg2[%c44] : memref<98xf32, #tpu.memory_space<smem>>
      %c45 = arith.constant 45 : index
      %84 = memref.load %arg2[%c45] : memref<98xf32, #tpu.memory_space<smem>>
      %c46 = arith.constant 46 : index
      %85 = memref.load %arg2[%c46] : memref<98xf32, #tpu.memory_space<smem>>
      %c47 = arith.constant 47 : index
      %86 = memref.load %arg2[%c47] : memref<98xf32, #tpu.memory_space<smem>>
      %c48 = arith.constant 48 : index
      %87 = memref.load %arg2[%c48] : memref<98xf32, #tpu.memory_space<smem>>
      %c49 = arith.constant 49 : index
      %88 = memref.load %arg2[%c49] : memref<98xf32, #tpu.memory_space<smem>>
      %c50 = arith.constant 50 : index
      %89 = memref.load %arg2[%c50] : memref<98xf32, #tpu.memory_space<smem>>
      %c51 = arith.constant 51 : index
      %90 = memref.load %arg2[%c51] : memref<98xf32, #tpu.memory_space<smem>>
      %c52 = arith.constant 52 : index
      %91 = memref.load %arg2[%c52] : memref<98xf32, #tpu.memory_space<smem>>
      %c53 = arith.constant 53 : index
      %92 = memref.load %arg2[%c53] : memref<98xf32, #tpu.memory_space<smem>>
      %c54 = arith.constant 54 : index
      %93 = memref.load %arg2[%c54] : memref<98xf32, #tpu.memory_space<smem>>
      %c55 = arith.constant 55 : index
      %94 = memref.load %arg2[%c55] : memref<98xf32, #tpu.memory_space<smem>>
      %c56 = arith.constant 56 : index
      %95 = memref.load %arg2[%c56] : memref<98xf32, #tpu.memory_space<smem>>
      %c57 = arith.constant 57 : index
      %96 = memref.load %arg2[%c57] : memref<98xf32, #tpu.memory_space<smem>>
      %c58 = arith.constant 58 : index
      %97 = memref.load %arg2[%c58] : memref<98xf32, #tpu.memory_space<smem>>
      %c59 = arith.constant 59 : index
      %98 = memref.load %arg2[%c59] : memref<98xf32, #tpu.memory_space<smem>>
      %c60 = arith.constant 60 : index
      %99 = memref.load %arg2[%c60] : memref<98xf32, #tpu.memory_space<smem>>
      %c61 = arith.constant 61 : index
      %100 = memref.load %arg2[%c61] : memref<98xf32, #tpu.memory_space<smem>>
      %c62 = arith.constant 62 : index
      %101 = memref.load %arg2[%c62] : memref<98xf32, #tpu.memory_space<smem>>
      %c63 = arith.constant 63 : index
      %102 = memref.load %arg2[%c63] : memref<98xf32, #tpu.memory_space<smem>>
      %c64 = arith.constant 64 : index
      %103 = memref.load %arg2[%c64] : memref<98xf32, #tpu.memory_space<smem>>
      %c65 = arith.constant 65 : index
      %104 = memref.load %arg2[%c65] : memref<98xf32, #tpu.memory_space<smem>>
      %c66 = arith.constant 66 : index
      %105 = memref.load %arg2[%c66] : memref<98xf32, #tpu.memory_space<smem>>
      %c67 = arith.constant 67 : index
      %106 = memref.load %arg2[%c67] : memref<98xf32, #tpu.memory_space<smem>>
      %c68 = arith.constant 68 : index
      %107 = memref.load %arg2[%c68] : memref<98xf32, #tpu.memory_space<smem>>
      %c69 = arith.constant 69 : index
      %108 = memref.load %arg2[%c69] : memref<98xf32, #tpu.memory_space<smem>>
      %c70 = arith.constant 70 : index
      %109 = memref.load %arg2[%c70] : memref<98xf32, #tpu.memory_space<smem>>
      %c71 = arith.constant 71 : index
      %110 = memref.load %arg2[%c71] : memref<98xf32, #tpu.memory_space<smem>>
      %c72 = arith.constant 72 : index
      %111 = memref.load %arg2[%c72] : memref<98xf32, #tpu.memory_space<smem>>
      %c73 = arith.constant 73 : index
      %112 = memref.load %arg2[%c73] : memref<98xf32, #tpu.memory_space<smem>>
      %c74 = arith.constant 74 : index
      %113 = memref.load %arg2[%c74] : memref<98xf32, #tpu.memory_space<smem>>
      %c75 = arith.constant 75 : index
      %114 = memref.load %arg2[%c75] : memref<98xf32, #tpu.memory_space<smem>>
      %c76 = arith.constant 76 : index
      %115 = memref.load %arg2[%c76] : memref<98xf32, #tpu.memory_space<smem>>
      %c77 = arith.constant 77 : index
      %116 = memref.load %arg2[%c77] : memref<98xf32, #tpu.memory_space<smem>>
      %c78 = arith.constant 78 : index
      %117 = memref.load %arg2[%c78] : memref<98xf32, #tpu.memory_space<smem>>
      %c79 = arith.constant 79 : index
      %118 = memref.load %arg2[%c79] : memref<98xf32, #tpu.memory_space<smem>>
      %c80 = arith.constant 80 : index
      %119 = memref.load %arg2[%c80] : memref<98xf32, #tpu.memory_space<smem>>
      %c81 = arith.constant 81 : index
      %120 = memref.load %arg2[%c81] : memref<98xf32, #tpu.memory_space<smem>>
      %c82 = arith.constant 82 : index
      %121 = memref.load %arg2[%c82] : memref<98xf32, #tpu.memory_space<smem>>
      %c83 = arith.constant 83 : index
      %122 = memref.load %arg2[%c83] : memref<98xf32, #tpu.memory_space<smem>>
      %c84 = arith.constant 84 : index
      %123 = memref.load %arg2[%c84] : memref<98xf32, #tpu.memory_space<smem>>
      %c85 = arith.constant 85 : index
      %124 = memref.load %arg2[%c85] : memref<98xf32, #tpu.memory_space<smem>>
      %c86 = arith.constant 86 : index
      %125 = memref.load %arg2[%c86] : memref<98xf32, #tpu.memory_space<smem>>
      %c87 = arith.constant 87 : index
      %126 = memref.load %arg2[%c87] : memref<98xf32, #tpu.memory_space<smem>>
      %c88 = arith.constant 88 : index
      %127 = memref.load %arg2[%c88] : memref<98xf32, #tpu.memory_space<smem>>
      %c89 = arith.constant 89 : index
      %128 = memref.load %arg2[%c89] : memref<98xf32, #tpu.memory_space<smem>>
      %c90 = arith.constant 90 : index
      %129 = memref.load %arg2[%c90] : memref<98xf32, #tpu.memory_space<smem>>
      %c91 = arith.constant 91 : index
      %130 = memref.load %arg2[%c91] : memref<98xf32, #tpu.memory_space<smem>>
      %c92 = arith.constant 92 : index
      %131 = memref.load %arg2[%c92] : memref<98xf32, #tpu.memory_space<smem>>
      %c93 = arith.constant 93 : index
      %132 = memref.load %arg2[%c93] : memref<98xf32, #tpu.memory_space<smem>>
      %c94 = arith.constant 94 : index
      %133 = memref.load %arg2[%c94] : memref<98xf32, #tpu.memory_space<smem>>
      %c95 = arith.constant 95 : index
      %134 = memref.load %arg2[%c95] : memref<98xf32, #tpu.memory_space<smem>>
      %c96 = arith.constant 96 : index
      %135 = memref.load %arg2[%c96] : memref<98xf32, #tpu.memory_space<smem>>
      %c97 = arith.constant 97 : index
      %136 = memref.load %arg2[%c97] : memref<98xf32, #tpu.memory_space<smem>>
      %c0_i32_36 = arith.constant 0 : i32
      %c2_i32_37 = arith.constant 2 : i32
      %137 = arith.addi %c0_i32_36, %c2_i32_37 : i32
      %c1_i32_38 = arith.constant 1 : i32
      scf.for %arg8 = %c0_i32_36 to %137 step %c1_i32_38  : i32 {
        %138 = arith.index_cast %arg8 : i32 to index
        %c0_40 = arith.constant 0 : index
        %c0_41 = arith.constant 0 : index
        %139 = vector.load %arg6[%138, %c0_40, %c0_41] : memref<2x16x16xf32, #tpu.memory_space<vmem>>, vector<1x16x16xf32>
        %140 = vector.shape_cast %139 : vector<1x16x16xf32> to vector<16x16xf32>
        %cst_42 = arith.constant 2.500000e-01 : f32
        %141 = vector.broadcast %cst_42 : f32 to vector<16x16xf32>
        %142 = arith.mulf %140, %141 : vector<16x16xf32>
        %c0_43 = arith.constant 0 : index
        %c3_44 = arith.constant 3 : index
        %c3_45 = arith.constant 3 : index
        %143 = vector.load %arg5[%c0_43, %c3_44, %c3_45] : memref<2x22x128xf32, #tpu.memory_space<vmem>>, vector<1x16x16xf32>
        %144 = vector.shape_cast %143 : vector<1x16x16xf32> to vector<16x16xf32>
        %145 = vector.shape_cast %142 : vector<16x16xf32> to vector<1x16x16xf32>
        tpu.vector_store %arg5[%c0_43, %c3_44, %c3_45], %145 {strides = array<i32>} : memref<2x22x128xf32, #tpu.memory_space<vmem>>, vector<1x16x16xf32>,
        %146 = arith.index_cast %arg8 : i32 to index
        %c0_46 = arith.constant 0 : index
        %c0_47 = arith.constant 0 : index
        %147 = vector.load %arg7[%146, %c0_46, %c0_47] : memref<2x16x16xf32, #tpu.memory_space<vmem>>, vector<1x16x16xf32>
        %148 = vector.shape_cast %147 : vector<1x16x16xf32> to vector<16x16xf32>
        %c1_48 = arith.constant 1 : index
        %c3_49 = arith.constant 3 : index
        %c3_50 = arith.constant 3 : index
        %149 = vector.load %arg5[%c1_48, %c3_49, %c3_50] : memref<2x22x128xf32, #tpu.memory_space<vmem>>, vector<1x16x16xf32>
        %150 = vector.shape_cast %149 : vector<1x16x16xf32> to vector<16x16xf32>
        %151 = vector.shape_cast %148 : vector<16x16xf32> to vector<1x16x16xf32>
        tpu.vector_store %arg5[%c1_48, %c3_49, %c3_50], %151 {strides = array<i32>} : memref<2x22x128xf32, #tpu.memory_space<vmem>>, vector<1x16x16xf32>,
        %cst_51 = arith.constant 0.000000e+00 : f32
        %152 = vector.broadcast %cst_51 : f32 to vector<16x128xf32>
        %c0_52 = arith.constant 0 : index
        %c0_53 = arith.constant 0 : index
        %c0_54 = arith.constant 0 : index
        %153 = vector.load %arg5[%c0_52, %c0_53, %c0_54] : memref<2x22x128xf32, #tpu.memory_space<vmem>>, vector<1x16x128xf32>
        %154 = vector.shape_cast %153 : vector<1x16x128xf32> to vector<16x128xf32>
        %155 = vector.broadcast %39 : f32 to vector<16x128xf32>
        %156 = arith.mulf %155, %154 : vector<16x128xf32>
        %157 = arith.addf %152, %156 : vector<16x128xf32>
        %c127_i32 = arith.constant 127 : i32
        %158 = tpu.dynamic_rotate %154 by %c127_i32 dim 1 : vector<16x128xf32>, i32 -> vector<16x128xf32>
        %159 = vector.broadcast %40 : f32 to vector<16x128xf32>
        %160 = arith.mulf %159, %158 : vector<16x128xf32>
        %161 = arith.addf %157, %160 : vector<16x128xf32>
        %c126_i32 = arith.constant 126 : i32
        %162 = tpu.dynamic_rotate %154 by %c126_i32 dim 1 : vector<16x128xf32>, i32 -> vector<16x128xf32>
        %163 = vector.broadcast %41 : f32 to vector<16x128xf32>
        %164 = arith.mulf %163, %162 : vector<16x128xf32>
        %165 = arith.addf %161, %164 : vector<16x128xf32>
        %c125_i32 = arith.constant 125 : i32
        %166 = tpu.dynamic_rotate %154 by %c125_i32 dim 1 : vector<16x128xf32>, i32 -> vector<16x128xf32>
        %167 = vector.broadcast %42 : f32 to vector<16x128xf32>
        %168 = arith.mulf %167, %166 : vector<16x128xf32>
        %169 = arith.addf %165, %168 : vector<16x128xf32>
        %c124_i32 = arith.constant 124 : i32
        %170 = tpu.dynamic_rotate %154 by %c124_i32 dim 1 : vector<16x128xf32>, i32 -> vector<16x128xf32>
        %171 = vector.broadcast %43 : f32 to vector<16x128xf32>
        %172 = arith.mulf %171, %170 : vector<16x128xf32>
        %173 = arith.addf %169, %172 : vector<16x128xf32>
        %c123_i32 = arith.constant 123 : i32
        %174 = tpu.dynamic_rotate %154 by %c123_i32 dim 1 : vector<16x128xf32>, i32 -> vector<16x128xf32>
        %175 = vector.broadcast %44 : f32 to vector<16x128xf32>
        %176 = arith.mulf %175, %174 : vector<16x128xf32>
        %177 = arith.addf %173, %176 : vector<16x128xf32>
        %c122_i32 = arith.constant 122 : i32
        %178 = tpu.dynamic_rotate %154 by %c122_i32 dim 1 : vector<16x128xf32>, i32 -> vector<16x128xf32>
        %179 = vector.broadcast %45 : f32 to vector<16x128xf32>
        %180 = arith.mulf %179, %178 : vector<16x128xf32>
        %181 = arith.addf %177, %180 : vector<16x128xf32>
        %c0_55 = arith.constant 0 : index
        %c1_56 = arith.constant 1 : index
        %c0_57 = arith.constant 0 : index
        %182 = vector.load %arg5[%c0_55, %c1_56, %c0_57] : memref<2x22x128xf32, #tpu.memory_space<vmem>>, vector<1x16x128xf32>
        %183 = vector.shape_cast %182 : vector<1x16x128xf32> to vector<16x128xf32>
        %184 = vector.broadcast %46 : f32 to vector<16x128xf32>
        %185 = arith.mulf %184, %183 : vector<16x128xf32>
        %186 = arith.addf %181, %185 : vector<16x128xf32>
        %c127_i32_58 = arith.constant 127 : i32
        %187 = tpu.dynamic_rotate %183 by %c127_i32_58 dim 1 : vector<16x128xf32>, i32 -> vector<16x128xf32>
        %188 = vector.broadcast %47 : f32 to vector<16x128xf32>
        %189 = arith.mulf %188, %187 : vector<16x128xf32>
        %190 = arith.addf %186, %189 : vector<16x128xf32>
        %c126_i32_59 = arith.constant 126 : i32
        %191 = tpu.dynamic_rotate %183 by %c126_i32_59 dim 1 : vector<16x128xf32>, i32 -> vector<16x128xf32>
        %192 = vector.broadcast %48 : f32 to vector<16x128xf32>
        %193 = arith.mulf %192, %191 : vector<16x128xf32>
        %194 = arith.addf %190, %193 : vector<16x128xf32>
        %c125_i32_60 = arith.constant 125 : i32
        %195 = tpu.dynamic_rotate %183 by %c125_i32_60 dim 1 : vector<16x128xf32>, i32 -> vector<16x128xf32>
        %196 = vector.broadcast %49 : f32 to vector<16x128xf32>
        %197 = arith.mulf %196, %195 : vector<16x128xf32>
        %198 = arith.addf %194, %197 : vector<16x128xf32>
        %c124_i32_61 = arith.constant 124 : i32
        %199 = tpu.dynamic_rotate %183 by %c124_i32_61 dim 1 : vector<16x128xf32>, i32 -> vector<16x128xf32>
        %200 = vector.broadcast %50 : f32 to vector<16x128xf32>
        %201 = arith.mulf %200, %199 : vector<16x128xf32>
        %202 = arith.addf %198, %201 : vector<16x128xf32>
        %c123_i32_62 = arith.constant 123 : i32
        %203 = tpu.dynamic_rotate %183 by %c123_i32_62 dim 1 : vector<16x128xf32>, i32 -> vector<16x128xf32>
        %204 = vector.broadcast %51 : f32 to vector<16x128xf32>
        %205 = arith.mulf %204, %203 : vector<16x128xf32>
        %206 = arith.addf %202, %205 : vector<16x128xf32>
        %c122_i32_63 = arith.constant 122 : i32
        %207 = tpu.dynamic_rotate %183 by %c122_i32_63 dim 1 : vector<16x128xf32>, i32 -> vector<16x128xf32>
        %208 = vector.broadcast %52 : f32 to vector<16x128xf32>
        %209 = arith.mulf %208, %207 : vector<16x128xf32>
        %210 = arith.addf %206, %209 : vector<16x128xf32>
        %c0_64 = arith.constant 0 : index
        %c2_65 = arith.constant 2 : index
        %c0_66 = arith.constant 0 : index
        %211 = vector.load %arg5[%c0_64, %c2_65, %c0_66] : memref<2x22x128xf32, #tpu.memory_space<vmem>>, vector<1x16x128xf32>
        %212 = vector.shape_cast %211 : vector<1x16x128xf32> to vector<16x128xf32>
        %213 = vector.broadcast %53 : f32 to vector<16x128xf32>
        %214 = arith.mulf %213, %212 : vector<16x128xf32>
        %215 = arith.addf %210, %214 : vector<16x128xf32>
        %c127_i32_67 = arith.constant 127 : i32
        %216 = tpu.dynamic_rotate %212 by %c127_i32_67 dim 1 : vector<16x128xf32>, i32 -> vector<16x128xf32>
        %217 = vector.broadcast %54 : f32 to vector<16x128xf32>
        %218 = arith.mulf %217, %216 : vector<16x128xf32>
        %219 = arith.addf %215, %218 : vector<16x128xf32>
        %c126_i32_68 = arith.constant 126 : i32
        %220 = tpu.dynamic_rotate %212 by %c126_i32_68 dim 1 : vector<16x128xf32>, i32 -> vector<16x128xf32>
        %221 = vector.broadcast %55 : f32 to vector<16x128xf32>
        %222 = arith.mulf %221, %220 : vector<16x128xf32>
        %223 = arith.addf %219, %222 : vector<16x128xf32>
        %c125_i32_69 = arith.constant 125 : i32
        %224 = tpu.dynamic_rotate %212 by %c125_i32_69 dim 1 : vector<16x128xf32>, i32 -> vector<16x128xf32>
        %225 = vector.broadcast %56 : f32 to vector<16x128xf32>
        %226 = arith.mulf %225, %224 : vector<16x128xf32>
        %227 = arith.addf %223, %226 : vector<16x128xf32>
        %c124_i32_70 = arith.constant 124 : i32
        %228 = tpu.dynamic_rotate %212 by %c124_i32_70 dim 1 : vector<16x128xf32>, i32 -> vector<16x128xf32>
        %229 = vector.broadcast %57 : f32 to vector<16x128xf32>
        %230 = arith.mulf %229, %228 : vector<16x128xf32>
        %231 = arith.addf %227, %230 : vector<16x128xf32>
        %c123_i32_71 = arith.constant 123 : i32
        %232 = tpu.dynamic_rotate %212 by %c123_i32_71 dim 1 : vector<16x128xf32>, i32 -> vector<16x128xf32>
        %233 = vector.broadcast %58 : f32 to vector<16x128xf32>
        %234 = arith.mulf %233, %232 : vector<16x128xf32>
        %235 = arith.addf %231, %234 : vector<16x128xf32>
        %c122_i32_72 = arith.constant 122 : i32
        %236 = tpu.dynamic_rotate %212 by %c122_i32_72 dim 1 : vector<16x128xf32>, i32 -> vector<16x128xf32>
        %237 = vector.broadcast %59 : f32 to vector<16x128xf32>
        %238 = arith.mulf %237, %236 : vector<16x128xf32>
        %239 = arith.addf %235, %238 : vector<16x128xf32>
        %c0_73 = arith.constant 0 : index
        %c3_74 = arith.constant 3 : index
        %c0_75 = arith.constant 0 : index
        %240 = vector.load %arg5[%c0_73, %c3_74, %c0_75] : memref<2x22x128xf32, #tpu.memory_space<vmem>>, vector<1x16x128xf32>
        %241 = vector.shape_cast %240 : vector<1x16x128xf32> to vector<16x128xf32>
        %242 = vector.broadcast %60 : f32 to vector<16x128xf32>
        %243 = arith.mulf %242, %241 : vector<16x128xf32>
        %244 = arith.addf %239, %243 : vector<16x128xf32>
        %c127_i32_76 = arith.constant 127 : i32
        %245 = tpu.dynamic_rotate %241 by %c127_i32_76 dim 1 : vector<16x128xf32>, i32 -> vector<16x128xf32>
        %246 = vector.broadcast %61 : f32 to vector<16x128xf32>
        %247 = arith.mulf %246, %245 : vector<16x128xf32>
        %248 = arith.addf %244, %247 : vector<16x128xf32>
        %c126_i32_77 = arith.constant 126 : i32
        %249 = tpu.dynamic_rotate %241 by %c126_i32_77 dim 1 : vector<16x128xf32>, i32 -> vector<16x128xf32>
        %250 = vector.broadcast %62 : f32 to vector<16x128xf32>
        %251 = arith.mulf %250, %249 : vector<16x128xf32>
        %252 = arith.addf %248, %251 : vector<16x128xf32>
        %c125_i32_78 = arith.constant 125 : i32
        %253 = tpu.dynamic_rotate %241 by %c125_i32_78 dim 1 : vector<16x128xf32>, i32 -> vector<16x128xf32>
        %254 = vector.broadcast %63 : f32 to vector<16x128xf32>
        %255 = arith.mulf %254, %253 : vector<16x128xf32>
        %256 = arith.addf %252, %255 : vector<16x128xf32>
        %c124_i32_79 = arith.constant 124 : i32
        %257 = tpu.dynamic_rotate %241 by %c124_i32_79 dim 1 : vector<16x128xf32>, i32 -> vector<16x128xf32>
        %258 = vector.broadcast %64 : f32 to vector<16x128xf32>
        %259 = arith.mulf %258, %257 : vector<16x128xf32>
        %260 = arith.addf %256, %259 : vector<16x128xf32>
        %c123_i32_80 = arith.constant 123 : i32
        %261 = tpu.dynamic_rotate %241 by %c123_i32_80 dim 1 : vector<16x128xf32>, i32 -> vector<16x128xf32>
        %262 = vector.broadcast %65 : f32 to vector<16x128xf32>
        %263 = arith.mulf %262, %261 : vector<16x128xf32>
        %264 = arith.addf %260, %263 : vector<16x128xf32>
        %c122_i32_81 = arith.constant 122 : i32
        %265 = tpu.dynamic_rotate %241 by %c122_i32_81 dim 1 : vector<16x128xf32>, i32 -> vector<16x128xf32>
        %266 = vector.broadcast %66 : f32 to vector<16x128xf32>
        %267 = arith.mulf %266, %265 : vector<16x128xf32>
        %268 = arith.addf %264, %267 : vector<16x128xf32>
        %c0_82 = arith.constant 0 : index
        %c4_83 = arith.constant 4 : index
        %c0_84 = arith.constant 0 : index
        %269 = vector.load %arg5[%c0_82, %c4_83, %c0_84] : memref<2x22x128xf32, #tpu.memory_space<vmem>>, vector<1x16x128xf32>
        %270 = vector.shape_cast %269 : vector<1x16x128xf32> to vector<16x128xf32>
        %271 = vector.broadcast %67 : f32 to vector<16x128xf32>
        %272 = arith.mulf %271, %270 : vector<16x128xf32>
        %273 = arith.addf %268, %272 : vector<16x128xf32>
        %c127_i32_85 = arith.constant 127 : i32
        %274 = tpu.dynamic_rotate %270 by %c127_i32_85 dim 1 : vector<16x128xf32>, i32 -> vector<16x128xf32>
        %275 = vector.broadcast %68 : f32 to vector<16x128xf32>
        %276 = arith.mulf %275, %274 : vector<16x128xf32>
        %277 = arith.addf %273, %276 : vector<16x128xf32>
        %c126_i32_86 = arith.constant 126 : i32
        %278 = tpu.dynamic_rotate %270 by %c126_i32_86 dim 1 : vector<16x128xf32>, i32 -> vector<16x128xf32>
        %279 = vector.broadcast %69 : f32 to vector<16x128xf32>
        %280 = arith.mulf %279, %278 : vector<16x128xf32>
        %281 = arith.addf %277, %280 : vector<16x128xf32>
        %c125_i32_87 = arith.constant 125 : i32
        %282 = tpu.dynamic_rotate %270 by %c125_i32_87 dim 1 : vector<16x128xf32>, i32 -> vector<16x128xf32>
        %283 = vector.broadcast %70 : f32 to vector<16x128xf32>
        %284 = arith.mulf %283, %282 : vector<16x128xf32>
        %285 = arith.addf %281, %284 : vector<16x128xf32>
        %c124_i32_88 = arith.constant 124 : i32
        %286 = tpu.dynamic_rotate %270 by %c124_i32_88 dim 1 : vector<16x128xf32>, i32 -> vector<16x128xf32>
        %287 = vector.broadcast %71 : f32 to vector<16x128xf32>
        %288 = arith.mulf %287, %286 : vector<16x128xf32>
        %289 = arith.addf %285, %288 : vector<16x128xf32>
        %c123_i32_89 = arith.constant 123 : i32
        %290 = tpu.dynamic_rotate %270 by %c123_i32_89 dim 1 : vector<16x128xf32>, i32 -> vector<16x128xf32>
        %291 = vector.broadcast %72 : f32 to vector<16x128xf32>
        %292 = arith.mulf %291, %290 : vector<16x128xf32>
        %293 = arith.addf %289, %292 : vector<16x128xf32>
        %c122_i32_90 = arith.constant 122 : i32
        %294 = tpu.dynamic_rotate %270 by %c122_i32_90 dim 1 : vector<16x128xf32>, i32 -> vector<16x128xf32>
        %295 = vector.broadcast %73 : f32 to vector<16x128xf32>
        %296 = arith.mulf %295, %294 : vector<16x128xf32>
        %297 = arith.addf %293, %296 : vector<16x128xf32>
        %c0_91 = arith.constant 0 : index
        %c5_92 = arith.constant 5 : index
        %c0_93 = arith.constant 0 : index
        %298 = vector.load %arg5[%c0_91, %c5_92, %c0_93] : memref<2x22x128xf32, #tpu.memory_space<vmem>>, vector<1x16x128xf32>
        %299 = vector.shape_cast %298 : vector<1x16x128xf32> to vector<16x128xf32>
        %300 = vector.broadcast %74 : f32 to vector<16x128xf32>
        %301 = arith.mulf %300, %299 : vector<16x128xf32>
        %302 = arith.addf %297, %301 : vector<16x128xf32>
        %c127_i32_94 = arith.constant 127 : i32
        %303 = tpu.dynamic_rotate %299 by %c127_i32_94 dim 1 : vector<16x128xf32>, i32 -> vector<16x128xf32>
        %304 = vector.broadcast %75 : f32 to vector<16x128xf32>
        %305 = arith.mulf %304, %303 : vector<16x128xf32>
        %306 = arith.addf %302, %305 : vector<16x128xf32>
        %c126_i32_95 = arith.constant 126 : i32
        %307 = tpu.dynamic_rotate %299 by %c126_i32_95 dim 1 : vector<16x128xf32>, i32 -> vector<16x128xf32>
        %308 = vector.broadcast %76 : f32 to vector<16x128xf32>
        %309 = arith.mulf %308, %307 : vector<16x128xf32>
        %310 = arith.addf %306, %309 : vector<16x128xf32>
        %c125_i32_96 = arith.constant 125 : i32
        %311 = tpu.dynamic_rotate %299 by %c125_i32_96 dim 1 : vector<16x128xf32>, i32 -> vector<16x128xf32>
        %312 = vector.broadcast %77 : f32 to vector<16x128xf32>
        %313 = arith.mulf %312, %311 : vector<16x128xf32>
        %314 = arith.addf %310, %313 : vector<16x128xf32>
        %c124_i32_97 = arith.constant 124 : i32
        %315 = tpu.dynamic_rotate %299 by %c124_i32_97 dim 1 : vector<16x128xf32>, i32 -> vector<16x128xf32>
        %316 = vector.broadcast %78 : f32 to vector<16x128xf32>
        %317 = arith.mulf %316, %315 : vector<16x128xf32>
        %318 = arith.addf %314, %317 : vector<16x128xf32>
        %c123_i32_98 = arith.constant 123 : i32
        %319 = tpu.dynamic_rotate %299 by %c123_i32_98 dim 1 : vector<16x128xf32>, i32 -> vector<16x128xf32>
        %320 = vector.broadcast %79 : f32 to vector<16x128xf32>
        %321 = arith.mulf %320, %319 : vector<16x128xf32>
        %322 = arith.addf %318, %321 : vector<16x128xf32>
        %c122_i32_99 = arith.constant 122 : i32
        %323 = tpu.dynamic_rotate %299 by %c122_i32_99 dim 1 : vector<16x128xf32>, i32 -> vector<16x128xf32>
        %324 = vector.broadcast %80 : f32 to vector<16x128xf32>
        %325 = arith.mulf %324, %323 : vector<16x128xf32>
        %326 = arith.addf %322, %325 : vector<16x128xf32>
        %c0_100 = arith.constant 0 : index
        %c6_101 = arith.constant 6 : index
        %c0_102 = arith.constant 0 : index
        %327 = vector.load %arg5[%c0_100, %c6_101, %c0_102] : memref<2x22x128xf32, #tpu.memory_space<vmem>>, vector<1x16x128xf32>
        %328 = vector.shape_cast %327 : vector<1x16x128xf32> to vector<16x128xf32>
        %329 = vector.broadcast %81 : f32 to vector<16x128xf32>
        %330 = arith.mulf %329, %328 : vector<16x128xf32>
        %331 = arith.addf %326, %330 : vector<16x128xf32>
        %c127_i32_103 = arith.constant 127 : i32
        %332 = tpu.dynamic_rotate %328 by %c127_i32_103 dim 1 : vector<16x128xf32>, i32 -> vector<16x128xf32>
        %333 = vector.broadcast %82 : f32 to vector<16x128xf32>
        %334 = arith.mulf %333, %332 : vector<16x128xf32>
        %335 = arith.addf %331, %334 : vector<16x128xf32>
        %c126_i32_104 = arith.constant 126 : i32
        %336 = tpu.dynamic_rotate %328 by %c126_i32_104 dim 1 : vector<16x128xf32>, i32 -> vector<16x128xf32>
        %337 = vector.broadcast %83 : f32 to vector<16x128xf32>
        %338 = arith.mulf %337, %336 : vector<16x128xf32>
        %339 = arith.addf %335, %338 : vector<16x128xf32>
        %c125_i32_105 = arith.constant 125 : i32
        %340 = tpu.dynamic_rotate %328 by %c125_i32_105 dim 1 : vector<16x128xf32>, i32 -> vector<16x128xf32>
        %341 = vector.broadcast %84 : f32 to vector<16x128xf32>
        %342 = arith.mulf %341, %340 : vector<16x128xf32>
        %343 = arith.addf %339, %342 : vector<16x128xf32>
        %c124_i32_106 = arith.constant 124 : i32
        %344 = tpu.dynamic_rotate %328 by %c124_i32_106 dim 1 : vector<16x128xf32>, i32 -> vector<16x128xf32>
        %345 = vector.broadcast %85 : f32 to vector<16x128xf32>
        %346 = arith.mulf %345, %344 : vector<16x128xf32>
        %347 = arith.addf %343, %346 : vector<16x128xf32>
        %c123_i32_107 = arith.constant 123 : i32
        %348 = tpu.dynamic_rotate %328 by %c123_i32_107 dim 1 : vector<16x128xf32>, i32 -> vector<16x128xf32>
        %349 = vector.broadcast %86 : f32 to vector<16x128xf32>
        %350 = arith.mulf %349, %348 : vector<16x128xf32>
        %351 = arith.addf %347, %350 : vector<16x128xf32>
        %c122_i32_108 = arith.constant 122 : i32
        %352 = tpu.dynamic_rotate %328 by %c122_i32_108 dim 1 : vector<16x128xf32>, i32 -> vector<16x128xf32>
        %353 = vector.broadcast %87 : f32 to vector<16x128xf32>
        %354 = arith.mulf %353, %352 : vector<16x128xf32>
        %355 = arith.addf %351, %354 : vector<16x128xf32>
        %c1_109 = arith.constant 1 : index
        %c0_110 = arith.constant 0 : index
        %c0_111 = arith.constant 0 : index
        %356 = vector.load %arg5[%c1_109, %c0_110, %c0_111] : memref<2x22x128xf32, #tpu.memory_space<vmem>>, vector<1x16x128xf32>
        %357 = vector.shape_cast %356 : vector<1x16x128xf32> to vector<16x128xf32>
        %358 = vector.broadcast %88 : f32 to vector<16x128xf32>
        %359 = arith.mulf %358, %357 : vector<16x128xf32>
        %360 = arith.addf %355, %359 : vector<16x128xf32>
        %c127_i32_112 = arith.constant 127 : i32
        %361 = tpu.dynamic_rotate %357 by %c127_i32_112 dim 1 : vector<16x128xf32>, i32 -> vector<16x128xf32>
        %362 = vector.broadcast %89 : f32 to vector<16x128xf32>
        %363 = arith.mulf %362, %361 : vector<16x128xf32>
        %364 = arith.addf %360, %363 : vector<16x128xf32>
        %c126_i32_113 = arith.constant 126 : i32
        %365 = tpu.dynamic_rotate %357 by %c126_i32_113 dim 1 : vector<16x128xf32>, i32 -> vector<16x128xf32>
        %366 = vector.broadcast %90 : f32 to vector<16x128xf32>
        %367 = arith.mulf %366, %365 : vector<16x128xf32>
        %368 = arith.addf %364, %367 : vector<16x128xf32>
        %c125_i32_114 = arith.constant 125 : i32
        %369 = tpu.dynamic_rotate %357 by %c125_i32_114 dim 1 : vector<16x128xf32>, i32 -> vector<16x128xf32>
        %370 = vector.broadcast %91 : f32 to vector<16x128xf32>
        %371 = arith.mulf %370, %369 : vector<16x128xf32>
        %372 = arith.addf %368, %371 : vector<16x128xf32>
        %c124_i32_115 = arith.constant 124 : i32
        %373 = tpu.dynamic_rotate %357 by %c124_i32_115 dim 1 : vector<16x128xf32>, i32 -> vector<16x128xf32>
        %374 = vector.broadcast %92 : f32 to vector<16x128xf32>
        %375 = arith.mulf %374, %373 : vector<16x128xf32>
        %376 = arith.addf %372, %375 : vector<16x128xf32>
        %c123_i32_116 = arith.constant 123 : i32
        %377 = tpu.dynamic_rotate %357 by %c123_i32_116 dim 1 : vector<16x128xf32>, i32 -> vector<16x128xf32>
        %378 = vector.broadcast %93 : f32 to vector<16x128xf32>
        %379 = arith.mulf %378, %377 : vector<16x128xf32>
        %380 = arith.addf %376, %379 : vector<16x128xf32>
        %c122_i32_117 = arith.constant 122 : i32
        %381 = tpu.dynamic_rotate %357 by %c122_i32_117 dim 1 : vector<16x128xf32>, i32 -> vector<16x128xf32>
        %382 = vector.broadcast %94 : f32 to vector<16x128xf32>
        %383 = arith.mulf %382, %381 : vector<16x128xf32>
        %384 = arith.addf %380, %383 : vector<16x128xf32>
        %c1_118 = arith.constant 1 : index
        %c1_119 = arith.constant 1 : index
        %c0_120 = arith.constant 0 : index
        %385 = vector.load %arg5[%c1_118, %c1_119, %c0_120] : memref<2x22x128xf32, #tpu.memory_space<vmem>>, vector<1x16x128xf32>
        %386 = vector.shape_cast %385 : vector<1x16x128xf32> to vector<16x128xf32>
        %387 = vector.broadcast %95 : f32 to vector<16x128xf32>
        %388 = arith.mulf %387, %386 : vector<16x128xf32>
        %389 = arith.addf %384, %388 : vector<16x128xf32>
        %c127_i32_121 = arith.constant 127 : i32
        %390 = tpu.dynamic_rotate %386 by %c127_i32_121 dim 1 : vector<16x128xf32>, i32 -> vector<16x128xf32>
        %391 = vector.broadcast %96 : f32 to vector<16x128xf32>
        %392 = arith.mulf %391, %390 : vector<16x128xf32>
        %393 = arith.addf %389, %392 : vector<16x128xf32>
        %c126_i32_122 = arith.constant 126 : i32
        %394 = tpu.dynamic_rotate %386 by %c126_i32_122 dim 1 : vector<16x128xf32>, i32 -> vector<16x128xf32>
        %395 = vector.broadcast %97 : f32 to vector<16x128xf32>
        %396 = arith.mulf %395, %394 : vector<16x128xf32>
        %397 = arith.addf %393, %396 : vector<16x128xf32>
        %c125_i32_123 = arith.constant 125 : i32
        %398 = tpu.dynamic_rotate %386 by %c125_i32_123 dim 1 : vector<16x128xf32>, i32 -> vector<16x128xf32>
        %399 = vector.broadcast %98 : f32 to vector<16x128xf32>
        %400 = arith.mulf %399, %398 : vector<16x128xf32>
        %401 = arith.addf %397, %400 : vector<16x128xf32>
        %c124_i32_124 = arith.constant 124 : i32
        %402 = tpu.dynamic_rotate %386 by %c124_i32_124 dim 1 : vector<16x128xf32>, i32 -> vector<16x128xf32>
        %403 = vector.broadcast %99 : f32 to vector<16x128xf32>
        %404 = arith.mulf %403, %402 : vector<16x128xf32>
        %405 = arith.addf %401, %404 : vector<16x128xf32>
        %c123_i32_125 = arith.constant 123 : i32
        %406 = tpu.dynamic_rotate %386 by %c123_i32_125 dim 1 : vector<16x128xf32>, i32 -> vector<16x128xf32>
        %407 = vector.broadcast %100 : f32 to vector<16x128xf32>
        %408 = arith.mulf %407, %406 : vector<16x128xf32>
        %409 = arith.addf %405, %408 : vector<16x128xf32>
        %c122_i32_126 = arith.constant 122 : i32
        %410 = tpu.dynamic_rotate %386 by %c122_i32_126 dim 1 : vector<16x128xf32>, i32 -> vector<16x128xf32>
        %411 = vector.broadcast %101 : f32 to vector<16x128xf32>
        %412 = arith.mulf %411, %410 : vector<16x128xf32>
        %413 = arith.addf %409, %412 : vector<16x128xf32>
        %c1_127 = arith.constant 1 : index
        %c2_128 = arith.constant 2 : index
        %c0_129 = arith.constant 0 : index
        %414 = vector.load %arg5[%c1_127, %c2_128, %c0_129] : memref<2x22x128xf32, #tpu.memory_space<vmem>>, vector<1x16x128xf32>
        %415 = vector.shape_cast %414 : vector<1x16x128xf32> to vector<16x128xf32>
        %416 = vector.broadcast %102 : f32 to vector<16x128xf32>
        %417 = arith.mulf %416, %415 : vector<16x128xf32>
        %418 = arith.addf %413, %417 : vector<16x128xf32>
        %c127_i32_130 = arith.constant 127 : i32
        %419 = tpu.dynamic_rotate %415 by %c127_i32_130 dim 1 : vector<16x128xf32>, i32 -> vector<16x128xf32>
        %420 = vector.broadcast %103 : f32 to vector<16x128xf32>
        %421 = arith.mulf %420, %419 : vector<16x128xf32>
        %422 = arith.addf %418, %421 : vector<16x128xf32>
        %c126_i32_131 = arith.constant 126 : i32
        %423 = tpu.dynamic_rotate %415 by %c126_i32_131 dim 1 : vector<16x128xf32>, i32 -> vector<16x128xf32>
        %424 = vector.broadcast %104 : f32 to vector<16x128xf32>
        %425 = arith.mulf %424, %423 : vector<16x128xf32>
        %426 = arith.addf %422, %425 : vector<16x128xf32>
        %c125_i32_132 = arith.constant 125 : i32
        %427 = tpu.dynamic_rotate %415 by %c125_i32_132 dim 1 : vector<16x128xf32>, i32 -> vector<16x128xf32>
        %428 = vector.broadcast %105 : f32 to vector<16x128xf32>
        %429 = arith.mulf %428, %427 : vector<16x128xf32>
        %430 = arith.addf %426, %429 : vector<16x128xf32>
        %c124_i32_133 = arith.constant 124 : i32
        %431 = tpu.dynamic_rotate %415 by %c124_i32_133 dim 1 : vector<16x128xf32>, i32 -> vector<16x128xf32>
        %432 = vector.broadcast %106 : f32 to vector<16x128xf32>
        %433 = arith.mulf %432, %431 : vector<16x128xf32>
        %434 = arith.addf %430, %433 : vector<16x128xf32>
        %c123_i32_134 = arith.constant 123 : i32
        %435 = tpu.dynamic_rotate %415 by %c123_i32_134 dim 1 : vector<16x128xf32>, i32 -> vector<16x128xf32>
        %436 = vector.broadcast %107 : f32 to vector<16x128xf32>
        %437 = arith.mulf %436, %435 : vector<16x128xf32>
        %438 = arith.addf %434, %437 : vector<16x128xf32>
        %c122_i32_135 = arith.constant 122 : i32
        %439 = tpu.dynamic_rotate %415 by %c122_i32_135 dim 1 : vector<16x128xf32>, i32 -> vector<16x128xf32>
        %440 = vector.broadcast %108 : f32 to vector<16x128xf32>
        %441 = arith.mulf %440, %439 : vector<16x128xf32>
        %442 = arith.addf %438, %441 : vector<16x128xf32>
        %c1_136 = arith.constant 1 : index
        %c3_137 = arith.constant 3 : index
        %c0_138 = arith.constant 0 : index
        %443 = vector.load %arg5[%c1_136, %c3_137, %c0_138] : memref<2x22x128xf32, #tpu.memory_space<vmem>>, vector<1x16x128xf32>
        %444 = vector.shape_cast %443 : vector<1x16x128xf32> to vector<16x128xf32>
        %445 = vector.broadcast %109 : f32 to vector<16x128xf32>
        %446 = arith.mulf %445, %444 : vector<16x128xf32>
        %447 = arith.addf %442, %446 : vector<16x128xf32>
        %c127_i32_139 = arith.constant 127 : i32
        %448 = tpu.dynamic_rotate %444 by %c127_i32_139 dim 1 : vector<16x128xf32>, i32 -> vector<16x128xf32>
        %449 = vector.broadcast %110 : f32 to vector<16x128xf32>
        %450 = arith.mulf %449, %448 : vector<16x128xf32>
        %451 = arith.addf %447, %450 : vector<16x128xf32>
        %c126_i32_140 = arith.constant 126 : i32
        %452 = tpu.dynamic_rotate %444 by %c126_i32_140 dim 1 : vector<16x128xf32>, i32 -> vector<16x128xf32>
        %453 = vector.broadcast %111 : f32 to vector<16x128xf32>
        %454 = arith.mulf %453, %452 : vector<16x128xf32>
        %455 = arith.addf %451, %454 : vector<16x128xf32>
        %c125_i32_141 = arith.constant 125 : i32
        %456 = tpu.dynamic_rotate %444 by %c125_i32_141 dim 1 : vector<16x128xf32>, i32 -> vector<16x128xf32>
        %457 = vector.broadcast %112 : f32 to vector<16x128xf32>
        %458 = arith.mulf %457, %456 : vector<16x128xf32>
        %459 = arith.addf %455, %458 : vector<16x128xf32>
        %c124_i32_142 = arith.constant 124 : i32
        %460 = tpu.dynamic_rotate %444 by %c124_i32_142 dim 1 : vector<16x128xf32>, i32 -> vector<16x128xf32>
        %461 = vector.broadcast %113 : f32 to vector<16x128xf32>
        %462 = arith.mulf %461, %460 : vector<16x128xf32>
        %463 = arith.addf %459, %462 : vector<16x128xf32>
        %c123_i32_143 = arith.constant 123 : i32
        %464 = tpu.dynamic_rotate %444 by %c123_i32_143 dim 1 : vector<16x128xf32>, i32 -> vector<16x128xf32>
        %465 = vector.broadcast %114 : f32 to vector<16x128xf32>
        %466 = arith.mulf %465, %464 : vector<16x128xf32>
        %467 = arith.addf %463, %466 : vector<16x128xf32>
        %c122_i32_144 = arith.constant 122 : i32
        %468 = tpu.dynamic_rotate %444 by %c122_i32_144 dim 1 : vector<16x128xf32>, i32 -> vector<16x128xf32>
        %469 = vector.broadcast %115 : f32 to vector<16x128xf32>
        %470 = arith.mulf %469, %468 : vector<16x128xf32>
        %471 = arith.addf %467, %470 : vector<16x128xf32>
        %c1_145 = arith.constant 1 : index
        %c4_146 = arith.constant 4 : index
        %c0_147 = arith.constant 0 : index
        %472 = vector.load %arg5[%c1_145, %c4_146, %c0_147] : memref<2x22x128xf32, #tpu.memory_space<vmem>>, vector<1x16x128xf32>
        %473 = vector.shape_cast %472 : vector<1x16x128xf32> to vector<16x128xf32>
        %474 = vector.broadcast %116 : f32 to vector<16x128xf32>
        %475 = arith.mulf %474, %473 : vector<16x128xf32>
        %476 = arith.addf %471, %475 : vector<16x128xf32>
        %c127_i32_148 = arith.constant 127 : i32
        %477 = tpu.dynamic_rotate %473 by %c127_i32_148 dim 1 : vector<16x128xf32>, i32 -> vector<16x128xf32>
        %478 = vector.broadcast %117 : f32 to vector<16x128xf32>
        %479 = arith.mulf %478, %477 : vector<16x128xf32>
        %480 = arith.addf %476, %479 : vector<16x128xf32>
        %c126_i32_149 = arith.constant 126 : i32
        %481 = tpu.dynamic_rotate %473 by %c126_i32_149 dim 1 : vector<16x128xf32>, i32 -> vector<16x128xf32>
        %482 = vector.broadcast %118 : f32 to vector<16x128xf32>
        %483 = arith.mulf %482, %481 : vector<16x128xf32>
        %484 = arith.addf %480, %483 : vector<16x128xf32>
        %c125_i32_150 = arith.constant 125 : i32
        %485 = tpu.dynamic_rotate %473 by %c125_i32_150 dim 1 : vector<16x128xf32>, i32 -> vector<16x128xf32>
        %486 = vector.broadcast %119 : f32 to vector<16x128xf32>
        %487 = arith.mulf %486, %485 : vector<16x128xf32>
        %488 = arith.addf %484, %487 : vector<16x128xf32>
        %c124_i32_151 = arith.constant 124 : i32
        %489 = tpu.dynamic_rotate %473 by %c124_i32_151 dim 1 : vector<16x128xf32>, i32 -> vector<16x128xf32>
        %490 = vector.broadcast %120 : f32 to vector<16x128xf32>
        %491 = arith.mulf %490, %489 : vector<16x128xf32>
        %492 = arith.addf %488, %491 : vector<16x128xf32>
        %c123_i32_152 = arith.constant 123 : i32
        %493 = tpu.dynamic_rotate %473 by %c123_i32_152 dim 1 : vector<16x128xf32>, i32 -> vector<16x128xf32>
        %494 = vector.broadcast %121 : f32 to vector<16x128xf32>
        %495 = arith.mulf %494, %493 : vector<16x128xf32>
        %496 = arith.addf %492, %495 : vector<16x128xf32>
        %c122_i32_153 = arith.constant 122 : i32
        %497 = tpu.dynamic_rotate %473 by %c122_i32_153 dim 1 : vector<16x128xf32>, i32 -> vector<16x128xf32>
        %498 = vector.broadcast %122 : f32 to vector<16x128xf32>
        %499 = arith.mulf %498, %497 : vector<16x128xf32>
        %500 = arith.addf %496, %499 : vector<16x128xf32>
        %c1_154 = arith.constant 1 : index
        %c5_155 = arith.constant 5 : index
        %c0_156 = arith.constant 0 : index
        %501 = vector.load %arg5[%c1_154, %c5_155, %c0_156] : memref<2x22x128xf32, #tpu.memory_space<vmem>>, vector<1x16x128xf32>
        %502 = vector.shape_cast %501 : vector<1x16x128xf32> to vector<16x128xf32>
        %503 = vector.broadcast %123 : f32 to vector<16x128xf32>
        %504 = arith.mulf %503, %502 : vector<16x128xf32>
        %505 = arith.addf %500, %504 : vector<16x128xf32>
        %c127_i32_157 = arith.constant 127 : i32
        %506 = tpu.dynamic_rotate %502 by %c127_i32_157 dim 1 : vector<16x128xf32>, i32 -> vector<16x128xf32>
        %507 = vector.broadcast %124 : f32 to vector<16x128xf32>
        %508 = arith.mulf %507, %506 : vector<16x128xf32>
        %509 = arith.addf %505, %508 : vector<16x128xf32>
        %c126_i32_158 = arith.constant 126 : i32
        %510 = tpu.dynamic_rotate %502 by %c126_i32_158 dim 1 : vector<16x128xf32>, i32 -> vector<16x128xf32>
        %511 = vector.broadcast %125 : f32 to vector<16x128xf32>
        %512 = arith.mulf %511, %510 : vector<16x128xf32>
        %513 = arith.addf %509, %512 : vector<16x128xf32>
        %c125_i32_159 = arith.constant 125 : i32
        %514 = tpu.dynamic_rotate %502 by %c125_i32_159 dim 1 : vector<16x128xf32>, i32 -> vector<16x128xf32>
        %515 = vector.broadcast %126 : f32 to vector<16x128xf32>
        %516 = arith.mulf %515, %514 : vector<16x128xf32>
        %517 = arith.addf %513, %516 : vector<16x128xf32>
        %c124_i32_160 = arith.constant 124 : i32
        %518 = tpu.dynamic_rotate %502 by %c124_i32_160 dim 1 : vector<16x128xf32>, i32 -> vector<16x128xf32>
        %519 = vector.broadcast %127 : f32 to vector<16x128xf32>
        %520 = arith.mulf %519, %518 : vector<16x128xf32>
        %521 = arith.addf %517, %520 : vector<16x128xf32>
        %c123_i32_161 = arith.constant 123 : i32
        %522 = tpu.dynamic_rotate %502 by %c123_i32_161 dim 1 : vector<16x128xf32>, i32 -> vector<16x128xf32>
        %523 = vector.broadcast %128 : f32 to vector<16x128xf32>
        %524 = arith.mulf %523, %522 : vector<16x128xf32>
        %525 = arith.addf %521, %524 : vector<16x128xf32>
        %c122_i32_162 = arith.constant 122 : i32
        %526 = tpu.dynamic_rotate %502 by %c122_i32_162 dim 1 : vector<16x128xf32>, i32 -> vector<16x128xf32>
        %527 = vector.broadcast %129 : f32 to vector<16x128xf32>
        %528 = arith.mulf %527, %526 : vector<16x128xf32>
        %529 = arith.addf %525, %528 : vector<16x128xf32>
        %c1_163 = arith.constant 1 : index
        %c6_164 = arith.constant 6 : index
        %c0_165 = arith.constant 0 : index
        %530 = vector.load %arg5[%c1_163, %c6_164, %c0_165] : memref<2x22x128xf32, #tpu.memory_space<vmem>>, vector<1x16x128xf32>
        %531 = vector.shape_cast %530 : vector<1x16x128xf32> to vector<16x128xf32>
        %532 = vector.broadcast %130 : f32 to vector<16x128xf32>
        %533 = arith.mulf %532, %531 : vector<16x128xf32>
        %534 = arith.addf %529, %533 : vector<16x128xf32>
        %c127_i32_166 = arith.constant 127 : i32
        %535 = tpu.dynamic_rotate %531 by %c127_i32_166 dim 1 : vector<16x128xf32>, i32 -> vector<16x128xf32>
        %536 = vector.broadcast %131 : f32 to vector<16x128xf32>
        %537 = arith.mulf %536, %535 : vector<16x128xf32>
        %538 = arith.addf %534, %537 : vector<16x128xf32>
        %c126_i32_167 = arith.constant 126 : i32
        %539 = tpu.dynamic_rotate %531 by %c126_i32_167 dim 1 : vector<16x128xf32>, i32 -> vector<16x128xf32>
        %540 = vector.broadcast %132 : f32 to vector<16x128xf32>
        %541 = arith.mulf %540, %539 : vector<16x128xf32>
        %542 = arith.addf %538, %541 : vector<16x128xf32>
        %c125_i32_168 = arith.constant 125 : i32
        %543 = tpu.dynamic_rotate %531 by %c125_i32_168 dim 1 : vector<16x128xf32>, i32 -> vector<16x128xf32>
        %544 = vector.broadcast %133 : f32 to vector<16x128xf32>
        %545 = arith.mulf %544, %543 : vector<16x128xf32>
        %546 = arith.addf %542, %545 : vector<16x128xf32>
        %c124_i32_169 = arith.constant 124 : i32
        %547 = tpu.dynamic_rotate %531 by %c124_i32_169 dim 1 : vector<16x128xf32>, i32 -> vector<16x128xf32>
        %548 = vector.broadcast %134 : f32 to vector<16x128xf32>
        %549 = arith.mulf %548, %547 : vector<16x128xf32>
        %550 = arith.addf %546, %549 : vector<16x128xf32>
        %c123_i32_170 = arith.constant 123 : i32
        %551 = tpu.dynamic_rotate %531 by %c123_i32_170 dim 1 : vector<16x128xf32>, i32 -> vector<16x128xf32>
        %552 = vector.broadcast %135 : f32 to vector<16x128xf32>
        %553 = arith.mulf %552, %551 : vector<16x128xf32>
        %554 = arith.addf %550, %553 : vector<16x128xf32>
        %c122_i32_171 = arith.constant 122 : i32
        %555 = tpu.dynamic_rotate %531 by %c122_i32_171 dim 1 : vector<16x128xf32>, i32 -> vector<16x128xf32>
        %556 = vector.broadcast %136 : f32 to vector<16x128xf32>
        %557 = arith.mulf %556, %555 : vector<16x128xf32>
        %558 = arith.addf %554, %557 : vector<16x128xf32>
        %cst_172 = arith.constant 0.000000e+00 : f32
        %559 = vector.broadcast %cst_172 : f32 to vector<16x128xf32>
        %560 = arith.subf %559, %558 : vector<16x128xf32>
        %561 = math.exp %560 : vector<16x128xf32>
        %cst_173 = arith.constant 1.000000e+00 : f32
        %562 = vector.broadcast %cst_173 : f32 to vector<16x128xf32>
        %563 = arith.addf %562, %561 : vector<16x128xf32>
        %cst_174 = arith.constant 1.000000e+00 : f32
        %564 = vector.broadcast %cst_174 : f32 to vector<16x128xf32>
        %565 = arith.divf %564, %563 : vector<16x128xf32>
        %566 = arith.index_cast %arg8 : i32 to index
        %c0_175 = arith.constant 0 : index
        %c0_176 = arith.constant 0 : index
        %c0_177 = arith.constant 0 : index
        %567 = vector.load %arg4[%566, %c0_175, %c0_176, %c0_177] : memref<2x1x16x128xf32, #tpu.memory_space<vmem>>, vector<1x1x16x128xf32>
        %568 = vector.shape_cast %567 : vector<1x1x16x128xf32> to vector<16x128xf32>
        %569 = vector.shape_cast %565 : vector<16x128xf32> to vector<1x1x16x128xf32>
        tpu.vector_store %arg4[%566, %c0_175, %c0_176, %c0_177], %569 {strides = array<i32>} : memref<2x1x16x128xf32, #tpu.memory_space<vmem>>, vector<1x1x16x128xf32>,
      }
      %c2_i32_39 = arith.constant 2 : i32
    } else {
    }
    return
  }
  func.func @transform_0(%arg0: i32, %arg1: i32) -> i32 {
    %c0_i32 = arith.constant 0 : i32
    %c0_i32_0 = arith.constant 0 : i32
    return %c0_i32 : i32
  }
  func.func @transform_1(%arg0: i32, %arg1: i32) -> (i32, i32, i32, i32) {
    %c0_i32 = arith.constant 0 : i32
    %c0_i32_0 = arith.constant 0 : i32
    %c0_i32_1 = arith.constant 0 : i32
    return %arg0, %arg1, %c0_i32, %c0_i32_0 : i32, i32, i32, i32
  }
  func.func @transform_2(%arg0: i32, %arg1: i32) -> (i32, i32, i32, i32) {
    %c0_i32 = arith.constant 0 : i32
    %c0_i32_0 = arith.constant 0 : i32
    %c0_i32_1 = arith.constant 0 : i32
    %c0_i32_2 = arith.constant 0 : i32
    return %arg0, %c0_i32, %c0_i32_0, %c0_i32_1 : i32, i32, i32, i32
  }
}

</mosaic_0001>

<llo_original>
// kernel: tpu_custom_call.1
$region0: #{tpu_custom_call.1}
  #allocation0 [shape = 'u32[]', space=smem, size = 0x4, offset = 0x4, fixed_abs, tag = 'smem constant byte address 0x4 - core index']
  #allocation1 [shape = 'u32[144,128]{1,0:T(1,128)}', space=vmem, size = 0x12000, scoped, tag = 'internal scratch']
  #allocation2 [shape = 'f32[2,22,128]{2,1,0:T(8,128)}', space=vmem, size = 0x6000, scoped, tag = 'scratch operand']
  #allocation3 [shape = 'f32[2,16,16]{2,1,0:T(8,128)}', space=vmem, size = 0x4000, scoped, tag = 'scratch operand']
  #allocation4 [shape = 'f32[2,16,16]{2,1,0:T(8,128)}', space=vmem, size = 0x4000, scoped, tag = 'scratch operand']
  %s0 = inlined_call_operand.hbm [shape: f32[98], index: 0, kind: input, shape index: {}]
  %s1 = inlined_call_operand.hbm [shape: f32[2,4,16,16], index: 1, kind: input, shape index: {}]
  %s2 = inlined_call_operand.hbm [shape: f32[2,1,16,128], index: 2, kind: output, shape index: {}]
  %s3 = sld [smem:[#allocation0]]
  $region48: #{tpu_custom_call.1} parent=0
    _
  %s5 = ssub.s32 1, %s3
  %s6 = scalar_select 0, %s5, %s3
  $region1: #{tpu_custom_call.1} parent=0
    #allocation5 [shape = 'u8[512]{0}', space=smem, size = 0x200, scoped, tag = 'input window, operand 0, single buffered']
    #allocation6 [shape = 's32[1]{0}', space=sflag, size = 0x4, scoped, tag = 'scoped memory for tpu_custom_call.1']
    #allocation7 [shape = 's32[1]{0}', space=sflag, size = 0x4, scoped, tag = 'scoped memory for tpu_custom_call.1']
    #allocation8 [shape = 's32[1]{0}', space=sflag, size = 0x4, scoped, tag = 'scoped memory for tpu_custom_call.1']
    #allocation9 [shape = 'u8[65536]{0}', space=vmem, size = 0x10000, scoped, tag = 'input window, operand 1, single buffered']
    #allocation10 [shape = 'u8[16384]{0}', space=vmem, size = 0x4000, scoped, tag = 'output window, operand 0, single buffered']
    %7 = vsyncpa [#allocation8], 0
    %8 = vsyncpa [#allocation6], 0
    %9 = vsyncpa [#allocation7], 0
    // Predicated region
    $region2: #{tpu_custom_call.1} parent=1 // pred_check
      _
    $region3: #{tpu_custom_call.1} parent=1 // pred_check_branch
      %11 = sbr.rel (0) target = $region5
    $region4: #{tpu_custom_call.1} parent=1 // pred_region
      %s13 = ssub.s32 16, 16
      %14 = vsyncadd [#allocation8], %s13
      %17 = dma.hbm_to_smem %s0, 16, [#allocation5], [#allocation8]
    $region5: #{tpu_custom_call.1} parent=1 // pred_fallthru
      _
    // Predicated region
    $region6: #{tpu_custom_call.1} parent=1 // pred_check
      _
    $region7: #{tpu_custom_call.1} parent=1 // pred_check_branch
      %19 = sbr.rel (0) target = $region9
    $region8: #{tpu_custom_call.1} parent=1 // pred_region
      %s21 = ssub.s32 2048, 2048
      %22 = vsyncadd [#allocation6], %s21
      %s23 = sshll.u32 [#allocation9], 4
      %s24 = int_to_ptr.vmem [resolvable:$true] %s23
      %29 = dma.hbm_to_vmem [thread:$0]  %s1, 2048, %s24, [#allocation6], 128, 128, 8
    $region9: #{tpu_custom_call.1} parent=1 // pred_fallthru
      _
    // Predicated region
    $region10: #{tpu_custom_call.1} parent=1 // pred_check
      _
    $region11: #{tpu_custom_call.1} parent=1 // pred_check_branch
      %31 = sbr.rel (0) target = $region13
    $region12: #{tpu_custom_call.1} parent=1 // pred_region
      %32 = dma.done [#allocation8], 16
    $region13: #{tpu_custom_call.1} parent=1 // pred_fallthru
      _
    // Predicated region
    $region14: #{tpu_custom_call.1} parent=1 // pred_check
      _
    $region15: #{tpu_custom_call.1} parent=1 // pred_check_branch
      %34 = sbr.rel (0) target = $region17
    $region16: #{tpu_custom_call.1} parent=1 // pred_region
      %35 = dma.done [#allocation6], 2048
    $region17: #{tpu_custom_call.1} parent=1 // pred_fallthru
      _
    %36 = sfence
    %p37 = scmp.eq.s32.totalorder 0, 0
    // Predicated region
    $region18: #{tpu_custom_call.1} parent=1 // pred_check
      %p38 = pneg %p37
    $region19: #{tpu_custom_call.1} parent=1 // pred_check_branch
      %40 = sbr.rel (%p38) target = $region21
    $region20: #{tpu_custom_call.1} parent=1 // pred_region
      %vm41 = vcmask 130048
      %42 = vst.msk [vmem:[#allocation3] sm:$0xff] %vm41, 0.0
      %43 = vst.msk [vmem:[#allocation3 + $0x8] sm:$0xff] %vm41, 0.0
      %44 = vst.msk [vmem:[#allocation3 + $0x10] sm:$0xff] %vm41, 0.0
      %45 = vst.msk [vmem:[#allocation3 + $0x18] sm:$0xff] %vm41, 0.0
      %46 = vst.msk [vmem:[#allocation4] sm:$0xff] %vm41, -inf
      %47 = vst.msk [vmem:[#allocation4 + $0x8] sm:$0xff] %vm41, -inf
      %48 = vst.msk [vmem:[#allocation4 + $0x10] sm:$0xff] %vm41, -inf
      %49 = vst.msk [vmem:[#allocation4 + $0x18] sm:$0xff] %vm41, -inf
    $region21: #{tpu_custom_call.1} parent=1 // pred_fallthru
      _
    loop: start=0, step=1, limit=2
    $region22: #{tpu_custom_call.1} parent=1 // loop_pre_header
      _
    $region23: #{tpu_custom_call.1} parent=1 // loop_header
      %s51 = sphi 0, %s55
      %p52 = scmp.ge.s32.totalorder %s51, 2
    $region24: #{tpu_custom_call.1} parent=1 // loop_header_branch
      %54 = sbr.rel (%p52) target = $region28
    $region25: #{tpu_custom_call.1} parent=1 // loop_body
      %s56 = smul.u32 %s51, 16
      %s57 = scalar_lea.vmem [#allocation3], %s56
      %v58 = vld [vmem:[%s57] sm:$0xff]
      %v59 = vld [vmem:[%s57 + $0x8] sm:$0xff]
      %s60 = scalar_lea.vmem [#allocation4], %s56
      %v61 = vld [vmem:[%s60] sm:$0xff]
      %v62 = vld [vmem:[%s60 + $0x8] sm:$0xff]
      %s63 = smul.u32 %s51, 64
      %s64 = scalar_lea.vmem [#allocation9], %s63
      %v65 = vld [vmem:[%s64] sm:$0xff]
      %v66 = vld [vmem:[%s64 + $0x8] sm:$0xff]
      %v67 = vadd.f32 %v58, %v65
      %v68 = vadd.f32 %v59, %v66
      %v69 = vmax.f32 %v61, %v65
      %v70 = vmax.f32 %v62, %v66
      %s71 = sadd.s32 16, %s63
      %s72 = scalar_lea.vmem [#allocation9], %s71
      %v73 = vld [vmem:[%s72] sm:$0xff]
      %v74 = vld [vmem:[%s72 + $0x8] sm:$0xff]
      %v75 = vadd.f32 %v67, %v73
      %v76 = vadd.f32 %v68, %v74
      %v77 = vmax.f32 %v69, %v73
      %v78 = vmax.f32 %v70, %v74
      %s79 = sadd.s32 32, %s63
      %s80 = scalar_lea.vmem [#allocation9], %s79
      %v81 = vld [vmem:[%s80] sm:$0xff]
      %v82 = vld [vmem:[%s80 + $0x8] sm:$0xff]
      %v83 = vadd.f32 %v75, %v81
      %v84 = vadd.f32 %v76, %v82
      %v85 = vmax.f32 %v77, %v81
      %v86 = vmax.f32 %v78, %v82
      %s87 = sadd.s32 48, %s63
      %s88 = scalar_lea.vmem [#allocation9], %s87
      %v89 = vld [vmem:[%s88] sm:$0xff]
      %v90 = vld [vmem:[%s88 + $0x8] sm:$0xff]
      %v91 = vadd.f32 %v83, %v89
      %v92 = vadd.f32 %v84, %v90
      %v93 = vmax.f32 %v85, %v89
      %v94 = vmax.f32 %v86, %v90
      %vm95 = vcmask 130048
      %96 = vst.msk [vmem:[%s57] sm:$0xff] %vm95, %v91
      %97 = vst.msk [vmem:[%s57 + $0x8] sm:$0xff] %vm95, %v92
      %98 = vst.msk [vmem:[%s60] sm:$0xff] %vm95, %v93
      %99 = vst.msk [vmem:[%s60 + $0x8] sm:$0xff] %vm95, %v94
    $region26: #{tpu_custom_call.1} parent=1 // loop_footer
      %s55 = sadd.s32 1, %s51
    $region27: #{tpu_custom_call.1} parent=1 // loop_footer_branch
      %50 = sbr.rel target = $region23
    $region28: #{tpu_custom_call.1} parent=1 // loop_exit
      _
    // Predicated region
    $region29: #{tpu_custom_call.1} parent=1 // pred_check
      %p100 = pneg %p37
    $region30: #{tpu_custom_call.1} parent=1 // pred_check_branch
      %102 = sbr.rel (%p100) target = $region32
    $region31: #{tpu_custom_call.1} parent=1 // pred_region
      %103 = vst [vmem:[#allocation2] sm:$0x7] 0.0
      %104 = vst [vmem:[#allocation2 + $0x13] sm:$0x7] 0.0
      %vm105 = vcmask 23552
      %106 = vst.msk [vmem:[#allocation2 + $0x3] sm:$0xff] %vm105, 0.0
      %107 = vst.msk [vmem:[#allocation2 + $0xb] sm:$0xff] %vm105, 0.0
      %vm108 = vcmask 1047704
      %109 = vst.msk [vmem:[#allocation2 + $0x3] sm:$0xff] %vm108, 0.0
      %110 = vst.msk [vmem:[#allocation2 + $0xb] sm:$0xff] %vm108, 0.0
      %s111 = scalar_lea.vmem [#allocation2], 24
      %112 = vst [vmem:[%s111] sm:$0x7] 0.0
      %113 = vst [vmem:[%s111 + $0x13] sm:$0x7] 0.0
      %114 = vst.msk [vmem:[%s111 + $0x3] sm:$0xff] %vm105, 0.0
      %115 = vst.msk [vmem:[%s111 + $0xb] sm:$0xff] %vm105, 0.0
      %116 = vst.msk [vmem:[%s111 + $0x3] sm:$0xff] %vm108, 0.0
      %117 = vst.msk [vmem:[%s111 + $0xb] sm:$0xff] %vm108, 0.0
      %s118 = sld [smem:[#allocation5]]
      %s119 = sld [smem:[#allocation5 + $0x1]]
      %s120 = sld [smem:[#allocation5 + $0x2]]
      %s121 = sld [smem:[#allocation5 + $0x3]]
      %s122 = sld [smem:[#allocation5 + $0x4]]
      %s123 = sld [smem:[#allocation5 + $0x5]]
      %s124 = sld [smem:[#allocation5 + $0x6]]
      %s125 = sld [smem:[#allocation5 + $0x7]]
      %s126 = sld [smem:[#allocation5 + $0x8]]
      %s127 = sld [smem:[#allocation5 + $0x9]]
      %s128 = sld [smem:[#allocation5 + $0xa]]
      %s129 = sld [smem:[#allocation5 + $0xb]]
      %s130 = sld [smem:[#allocation5 + $0xc]]
      %s131 = sld [smem:[#allocation5 + $0xd]]
      %s132 = sld [smem:[#allocation5 + $0xe]]
      %s133 = sld [smem:[#allocation5 + $0xf]]
      %s134 = sld [smem:[#allocation5 + $0x10]]
      %s135 = sld [smem:[#allocation5 + $0x11]]
      %s136 = sld [smem:[#allocation5 + $0x12]]
      %s137 = sld [smem:[#allocation5 + $0x13]]
      %s138 = sld [smem:[#allocation5 + $0x14]]
      %s139 = sld [smem:[#allocation5 + $0x15]]
      %s140 = sld [smem:[#allocation5 + $0x16]]
      %s141 = sld [smem:[#allocation5 + $0x17]]
      %s142 = sld [smem:[#allocation5 + $0x18]]
      %s143 = sld [smem:[#allocation5 + $0x19]]
      %s144 = sld [smem:[#allocation5 + $0x1a]]
      %s145 = sld [smem:[#allocation5 + $0x1b]]
      %s146 = sld [smem:[#allocation5 + $0x1c]]
      %s147 = sld [smem:[#allocation5 + $0x1d]]
      %s148 = sld [smem:[#allocation5 + $0x1e]]
      %s149 = sld [smem:[#allocation5 + $0x1f]]
      %s150 = sld [smem:[#allocation5 + $0x20]]
      %s151 = sld [smem:[#allocation5 + $0x21]]
      %s152 = sld [smem:[#allocation5 + $0x22]]
      %s153 = sld [smem:[#allocation5 + $0x23]]
      %s154 = sld [smem:[#allocation5 + $0x24]]
      %s155 = sld [smem:[#allocation5 + $0x25]]
      %s156 = sld [smem:[#allocation5 + $0x26]]
      %s157 = sld [smem:[#allocation5 + $0x27]]
      %s158 = sld [smem:[#allocation5 + $0x28]]
      %s159 = sld [smem:[#allocation5 + $0x29]]
      %s160 = sld [smem:[#allocation5 + $0x2a]]
      %s161 = sld [smem:[#allocation5 + $0x2b]]
      %s162 = sld [smem:[#allocation5 + $0x2c]]
      %s163 = sld [smem:[#allocation5 + $0x2d]]
      %s164 = sld [smem:[#allocation5 + $0x2e]]
      %s165 = sld [smem:[#allocation5 + $0x2f]]
      %s166 = sld [smem:[#allocation5 + $0x30]]
      %s167 = sld [smem:[#allocation5 + $0x31]]
      %s168 = sld [smem:[#allocation5 + $0x32]]
      %s169 = sld [smem:[#allocation5 + $0x33]]
      %s170 = sld [smem:[#allocation5 + $0x34]]
      %s171 = sld [smem:[#allocation5 + $0x35]]
      %s172 = sld [smem:[#allocation5 + $0x36]]
      %s173 = sld [smem:[#allocation5 + $0x37]]
      %s174 = sld [smem:[#allocation5 + $0x38]]
      %s175 = sld [smem:[#allocation5 + $0x39]]
      %s176 = sld [smem:[#allocation5 + $0x3a]]
      %s177 = sld [smem:[#allocation5 + $0x3b]]
      %s178 = sld [smem:[#allocation5 + $0x3c]]
      %s179 = sld [smem:[#allocation5 + $0x3d]]
      %s180 = sld [smem:[#allocation5 + $0x3e]]
      %s181 = sld [smem:[#allocation5 + $0x3f]]
      %s182 = sld [smem:[#allocation5 + $0x40]]
      %s183 = sld [smem:[#allocation5 + $0x41]]
      %s184 = sld [smem:[#allocation5 + $0x42]]
      %s185 = sld [smem:[#allocation5 + $0x43]]
      %s186 = sld [smem:[#allocation5 + $0x44]]
      %s187 = sld [smem:[#allocation5 + $0x45]]
      %s188 = sld [smem:[#allocation5 + $0x46]]
      %s189 = sld [smem:[#allocation5 + $0x47]]
      %s190 = sld [smem:[#allocation5 + $0x48]]
      %s191 = sld [smem:[#allocation5 + $0x49]]
      %s192 = sld [smem:[#allocation5 + $0x4a]]
      %s193 = sld [smem:[#allocation5 + $0x4b]]
      %s194 = sld [smem:[#allocation5 + $0x4c]]
      %s195 = sld [smem:[#allocation5 + $0x4d]]
      %s196 = sld [smem:[#allocation5 + $0x4e]]
      %s197 = sld [smem:[#allocation5 + $0x4f]]
      %s198 = sld [smem:[#allocation5 + $0x50]]
      %s199 = sld [smem:[#allocation5 + $0x51]]
      %s200 = sld [smem:[#allocation5 + $0x52]]
      %s201 = sld [smem:[#allocation5 + $0x53]]
      %s202 = sld [smem:[#allocation5 + $0x54]]
      %s203 = sld [smem:[#allocation5 + $0x55]]
      %s204 = sld [smem:[#allocation5 + $0x56]]
      %s205 = sld [smem:[#allocation5 + $0x57]]
      %s206 = sld [smem:[#allocation5 + $0x58]]
      %s207 = sld [smem:[#allocation5 + $0x59]]
      %s208 = sld [smem:[#allocation5 + $0x5a]]
      %s209 = sld [smem:[#allocation5 + $0x5b]]
      %s210 = sld [smem:[#allocation5 + $0x5c]]
      %s211 = sld [smem:[#allocation5 + $0x5d]]
      %s212 = sld [smem:[#allocation5 + $0x5e]]
      %s213 = sld [smem:[#allocation5 + $0x5f]]
      %s214 = sld [smem:[#allocation5 + $0x60]]
      %s215 = sld [smem:[#allocation5 + $0x61]]
      loop: start=0, step=1, limit=2
      $region33: #{tpu_custom_call.1} parent=31 // loop_pre_header
        _
      $region34: #{tpu_custom_call.1} parent=31 // loop_header
        %s217 = sphi 0, %s221
        %p218 = scmp.ge.s32.totalorder %s217, 2
      $region35: #{tpu_custom_call.1} parent=31 // loop_header_branch
        %220 = sbr.rel (%p218) target = $region39
      $region36: #{tpu_custom_call.1} parent=31 // loop_body
        %s222 = smul.u32 %s217, 16
        %s223 = scalar_lea.vmem [#allocation3], %s222
        %v224 = vld [vmem:[%s223] sm:$0xff]
        %v225 = vld [vmem:[%s223 + $0x8] sm:$0xff]
        %v226 = vmul.f32 %v224, 0.25
        %v227 = vmul.f32 %v225, 0.25
        %230 = vrot.lane.b32.xlu0 %v226, 3
        %v231 = vpop.permute.xlu0 %230
        %232 = vrot.lane.b32.xlu0 %v227, 3
        %v233 = vpop.permute.xlu0 %232
        %vm236 = vcmask 154648
        %237 = vst.msk [vmem:[#allocation2 + $0x3] sm:$0xff] %vm236, %v231
        %238 = vst.msk [vmem:[#allocation2 + $0xb] sm:$0xff] %vm236, %v233
        %s239 = scalar_lea.vmem [#allocation4], %s222
        %v240 = vld [vmem:[%s239] sm:$0xff]
        %v241 = vld [vmem:[%s239 + $0x8] sm:$0xff]
        %244 = vrot.lane.b32.xlu0 %v240, 3
        %v245 = vpop.permute.xlu0 %244
        %246 = vrot.lane.b32.xlu0 %v241, 3
        %v247 = vpop.permute.xlu0 %246
        %250 = vst.msk [vmem:[%s111 + $0x3] sm:$0xff] %vm236, %v245
        %251 = vst.msk [vmem:[%s111 + $0xb] sm:$0xff] %vm236, %v247
        %v252 = vld [vmem:[#allocation2] sm:$0xff]
        %v253 = vld [vmem:[#allocation2 + $0x8] sm:$0xff]
        %v254 = vstv %s118
        %v255 = vmul.f32 %v254, %v252
        %v256 = vmul.f32 %v254, %v253
        %v257 = vadd.f32 %v255, 0.0
        %v258 = vadd.f32 %v256, 0.0
        %259 = vrot.lane.b32.xlu0 %v252, 127
        %v260 = vpop.permute.xlu0 %259
        %261 = vrot.lane.b32.xlu0 %v253, 127
        %v262 = vpop.permute.xlu0 %261
        %v263 = vstv %s119
        %v264 = vmul.f32 %v263, %v260
        %v265 = vmul.f32 %v263, %v262
        %v266 = vadd.f32 %v257, %v264
        %v267 = vadd.f32 %v258, %v265
        %268 = vrot.lane.b32.xlu0 %v252, 126
        %v269 = vpop.permute.xlu0 %268
        %270 = vrot.lane.b32.xlu0 %v253, 126
        %v271 = vpop.permute.xlu0 %270
        %v272 = vstv %s120
        %v273 = vmul.f32 %v272, %v269
        %v274 = vmul.f32 %v272, %v271
        %v275 = vadd.f32 %v266, %v273
        %v276 = vadd.f32 %v267, %v274
        %277 = vrot.lane.b32.xlu0 %v252, 125
        %v278 = vpop.permute.xlu0 %277
        %279 = vrot.lane.b32.xlu0 %v253, 125
        %v280 = vpop.permute.xlu0 %279
        %v281 = vstv %s121
        %v282 = vmul.f32 %v281, %v278
        %v283 = vmul.f32 %v281, %v280
        %v284 = vadd.f32 %v275, %v282
        %v285 = vadd.f32 %v276, %v283
        %286 = vrot.lane.b32.xlu0 %v252, 124
        %v287 = vpop.permute.xlu0 %286
        %288 = vrot.lane.b32.xlu0 %v253, 124
        %v289 = vpop.permute.xlu0 %288
        %v290 = vstv %s122
        %v291 = vmul.f32 %v290, %v287
        %v292 = vmul.f32 %v290, %v289
        %v293 = vadd.f32 %v284, %v291
        %v294 = vadd.f32 %v285, %v292
        %295 = vrot.lane.b32.xlu0 %v252, 123
        %v296 = vpop.permute.xlu0 %295
        %297 = vrot.lane.b32.xlu0 %v253, 123
        %v298 = vpop.permute.xlu0 %297
        %v299 = vstv %s123
        %v300 = vmul.f32 %v299, %v296
        %v301 = vmul.f32 %v299, %v298
        %v302 = vadd.f32 %v293, %v300
        %v303 = vadd.f32 %v294, %v301
        %304 = vrot.lane.b32.xlu0 %v252, 122
        %v305 = vpop.permute.xlu0 %304
        %306 = vrot.lane.b32.xlu0 %v253, 122
        %v307 = vpop.permute.xlu0 %306
        %v308 = vstv %s124
        %v309 = vmul.f32 %v308, %v305
        %v310 = vmul.f32 %v308, %v307
        %v311 = vadd.f32 %v302, %v309
        %v312 = vadd.f32 %v303, %v310
        %v313 = vld [vmem:[#allocation2 + $0x1] sm:$0xff]
        %v314 = vld [vmem:[#allocation2 + $0x9] sm:$0xff]
        %v315 = vstv %s125
        %v316 = vmul.f32 %v315, %v313
        %v317 = vmul.f32 %v315, %v314
        %v318 = vadd.f32 %v311, %v316
        %v319 = vadd.f32 %v312, %v317
        %320 = vrot.lane.b32.xlu0 %v313, 127
        %v321 = vpop.permute.xlu0 %320
        %322 = vrot.lane.b32.xlu0 %v314, 127
        %v323 = vpop.permute.xlu0 %322
        %v324 = vstv %s126
        %v325 = vmul.f32 %v324, %v321
        %v326 = vmul.f32 %v324, %v323
        %v327 = vadd.f32 %v318, %v325
        %v328 = vadd.f32 %v319, %v326
        %329 = vrot.lane.b32.xlu0 %v313, 126
        %v330 = vpop.permute.xlu0 %329
        %331 = vrot.lane.b32.xlu0 %v314, 126
        %v332 = vpop.permute.xlu0 %331
        %v333 = vstv %s127
        %v334 = vmul.f32 %v333, %v330
        %v335 = vmul.f32 %v333, %v332
        %v336 = vadd.f32 %v327, %v334
        %v337 = vadd.f32 %v328, %v335
        %338 = vrot.lane.b32.xlu0 %v313, 125
        %v339 = vpop.permute.xlu0 %338
        %340 = vrot.lane.b32.xlu0 %v314, 125
        %v341 = vpop.permute.xlu0 %340
        %v342 = vstv %s128
        %v343 = vmul.f32 %v342, %v339
        %v344 = vmul.f32 %v342, %v341
        %v345 = vadd.f32 %v336, %v343
        %v346 = vadd.f32 %v337, %v344
        %347 = vrot.lane.b32.xlu0 %v313, 124
        %v348 = vpop.permute.xlu0 %347
        %349 = vrot.lane.b32.xlu0 %v314, 124
        %v350 = vpop.permute.xlu0 %349
        %v351 = vstv %s129
        %v352 = vmul.f32 %v351, %v348
        %v353 = vmul.f32 %v351, %v350
        %v354 = vadd.f32 %v345, %v352
        %v355 = vadd.f32 %v346, %v353
        %356 = vrot.lane.b32.xlu0 %v313, 123
        %v357 = vpop.permute.xlu0 %356
        %358 = vrot.lane.b32.xlu0 %v314, 123
        %v359 = vpop.permute.xlu0 %358
        %v360 = vstv %s130
        %v361 = vmul.f32 %v360, %v357
        %v362 = vmul.f32 %v360, %v359
        %v363 = vadd.f32 %v354, %v361
        %v364 = vadd.f32 %v355, %v362
        %365 = vrot.lane.b32.xlu0 %v313, 122
        %v366 = vpop.permute.xlu0 %365
        %367 = vrot.lane.b32.xlu0 %v314, 122
        %v368 = vpop.permute.xlu0 %367
        %v369 = vstv %s131
        %v370 = vmul.f32 %v369, %v366
        %v371 = vmul.f32 %v369, %v368
        %v372 = vadd.f32 %v363, %v370
        %v373 = vadd.f32 %v364, %v371
        %v374 = vld [vmem:[#allocation2 + $0x2] sm:$0xff]
        %v375 = vld [vmem:[#allocation2 + $0xa] sm:$0xff]
        %v376 = vstv %s132
        %v377 = vmul.f32 %v376, %v374
        %v378 = vmul.f32 %v376, %v375
        %v379 = vadd.f32 %v372, %v377
        %v380 = vadd.f32 %v373, %v378
        %381 = vrot.lane.b32.xlu0 %v374, 127
        %v382 = vpop.permute.xlu0 %381
        %383 = vrot.lane.b32.xlu0 %v375, 127
        %v384 = vpop.permute.xlu0 %383
        %v385 = vstv %s133
        %v386 = vmul.f32 %v385, %v382
        %v387 = vmul.f32 %v385, %v384
        %v388 = vadd.f32 %v379, %v386
        %v389 = vadd.f32 %v380, %v387
        %390 = vrot.lane.b32.xlu0 %v374, 126
        %v391 = vpop.permute.xlu0 %390
        %392 = vrot.lane.b32.xlu0 %v375, 126
        %v393 = vpop.permute.xlu0 %392
        %v394 = vstv %s134
        %v395 = vmul.f32 %v394, %v391
        %v396 = vmul.f32 %v394, %v393
        %v397 = vadd.f32 %v388, %v395
        %v398 = vadd.f32 %v389, %v396
        %399 = vrot.lane.b32.xlu0 %v374, 125
        %v400 = vpop.permute.xlu0 %399
        %401 = vrot.lane.b32.xlu0 %v375, 125
        %v402 = vpop.permute.xlu0 %401
        %v403 = vstv %s135
        %v404 = vmul.f32 %v403, %v400
        %v405 = vmul.f32 %v403, %v402
        %v406 = vadd.f32 %v397, %v404
        %v407 = vadd.f32 %v398, %v405
        %408 = vrot.lane.b32.xlu0 %v374, 124
        %v409 = vpop.permute.xlu0 %408
        %410 = vrot.lane.b32.xlu0 %v375, 124
        %v411 = vpop.permute.xlu0 %410
        %v412 = vstv %s136
        %v413 = vmul.f32 %v412, %v409
        %v414 = vmul.f32 %v412, %v411
        %v415 = vadd.f32 %v406, %v413
        %v416 = vadd.f32 %v407, %v414
        %417 = vrot.lane.b32.xlu0 %v374, 123
        %v418 = vpop.permute.xlu0 %417
        %419 = vrot.lane.b32.xlu0 %v375, 123
        %v420 = vpop.permute.xlu0 %419
        %v421 = vstv %s137
        %v422 = vmul.f32 %v421, %v418
        %v423 = vmul.f32 %v421, %v420
        %v424 = vadd.f32 %v415, %v422
        %v425 = vadd.f32 %v416, %v423
        %426 = vrot.lane.b32.xlu0 %v374, 122
        %v427 = vpop.permute.xlu0 %426
        %428 = vrot.lane.b32.xlu0 %v375, 122
        %v429 = vpop.permute.xlu0 %428
        %v430 = vstv %s138
        %v431 = vmul.f32 %v430, %v427
        %v432 = vmul.f32 %v430, %v429
        %v433 = vadd.f32 %v424, %v431
        %v434 = vadd.f32 %v425, %v432
        %v435 = vld [vmem:[#allocation2 + $0x3] sm:$0xff]
        %v436 = vld [vmem:[#allocation2 + $0xb] sm:$0xff]
        %v437 = vstv %s139
        %v438 = vmul.f32 %v437, %v435
        %v439 = vmul.f32 %v437, %v436
        %v440 = vadd.f32 %v433, %v438
        %v441 = vadd.f32 %v434, %v439
        %442 = vrot.lane.b32.xlu0 %v435, 127
        %v443 = vpop.permute.xlu0 %442
        %444 = vrot.lane.b32.xlu0 %v436, 127
        %v445 = vpop.permute.xlu0 %444
        %v446 = vstv %s140
        %v447 = vmul.f32 %v446, %v443
        %v448 = vmul.f32 %v446, %v445
        %v449 = vadd.f32 %v440, %v447
        %v450 = vadd.f32 %v441, %v448
        %451 = vrot.lane.b32.xlu0 %v435, 126
        %v452 = vpop.permute.xlu0 %451
        %453 = vrot.lane.b32.xlu0 %v436, 126
        %v454 = vpop.permute.xlu0 %453
        %v455 = vstv %s141
        %v456 = vmul.f32 %v455, %v452
        %v457 = vmul.f32 %v455, %v454
        %v458 = vadd.f32 %v449, %v456
        %v459 = vadd.f32 %v450, %v457
        %460 = vrot.lane.b32.xlu0 %v435, 125
        %v461 = vpop.permute.xlu0 %460
        %462 = vrot.lane.b32.xlu0 %v436, 125
        %v463 = vpop.permute.xlu0 %462
        %v464 = vstv %s142
        %v465 = vmul.f32 %v464, %v461
        %v466 = vmul.f32 %v464, %v463
        %v467 = vadd.f32 %v458, %v465
        %v468 = vadd.f32 %v459, %v466
        %469 = vrot.lane.b32.xlu0 %v435, 124
        %v470 = vpop.permute.xlu0 %469
        %471 = vrot.lane.b32.xlu0 %v436, 124
        %v472 = vpop.permute.xlu0 %471
        %v473 = vstv %s143
        %v474 = vmul.f32 %v473, %v470
        %v475 = vmul.f32 %v473, %v472
        %v476 = vadd.f32 %v467, %v474
        %v477 = vadd.f32 %v468, %v475
        %478 = vrot.lane.b32.xlu0 %v435, 123
        %v479 = vpop.permute.xlu0 %478
        %480 = vrot.lane.b32.xlu0 %v436, 123
        %v481 = vpop.permute.xlu0 %480
        %v482 = vstv %s144
        %v483 = vmul.f32 %v482, %v479
        %v484 = vmul.f32 %v482, %v481
        %v485 = vadd.f32 %v476, %v483
        %v486 = vadd.f32 %v477, %v484
        %487 = vrot.lane.b32.xlu0 %v435, 122
        %v488 = vpop.permute.xlu0 %487
        %489 = vrot.lane.b32.xlu0 %v436, 122
        %v490 = vpop.permute.xlu0 %489
        %v491 = vstv %s145
        %v492 = vmul.f32 %v491, %v488
        %v493 = vmul.f32 %v491, %v490
        %v494 = vadd.f32 %v485, %v492
        %v495 = vadd.f32 %v486, %v493
        %v496 = vld [vmem:[#allocation2 + $0x4] sm:$0xff]
        %v497 = vld [vmem:[#allocation2 + $0xc] sm:$0xff]
        %v498 = vstv %s146
        %v499 = vmul.f32 %v498, %v496
        %v500 = vmul.f32 %v498, %v497
        %v501 = vadd.f32 %v494, %v499
        %v502 = vadd.f32 %v495, %v500
        %503 = vrot.lane.b32.xlu0 %v496, 127
        %v504 = vpop.permute.xlu0 %503
        %505 = vrot.lane.b32.xlu0 %v497, 127
        %v506 = vpop.permute.xlu0 %505
        %v507 = vstv %s147
        %v508 = vmul.f32 %v507, %v504
        %v509 = vmul.f32 %v507, %v506
        %v510 = vadd.f32 %v501, %v508
        %v511 = vadd.f32 %v502, %v509
        %512 = vrot.lane.b32.xlu0 %v496, 126
        %v513 = vpop.permute.xlu0 %512
        %514 = vrot.lane.b32.xlu0 %v497, 126
        %v515 = vpop.permute.xlu0 %514
        %v516 = vstv %s148
        %v517 = vmul.f32 %v516, %v513
        %v518 = vmul.f32 %v516, %v515
        %v519 = vadd.f32 %v510, %v517
        %v520 = vadd.f32 %v511, %v518
        %521 = vrot.lane.b32.xlu0 %v496, 125
        %v522 = vpop.permute.xlu0 %521
        %523 = vrot.lane.b32.xlu0 %v497, 125
        %v524 = vpop.permute.xlu0 %523
        %v525 = vstv %s149
        %v526 = vmul.f32 %v525, %v522
        %v527 = vmul.f32 %v525, %v524
        %v528 = vadd.f32 %v519, %v526
        %v529 = vadd.f32 %v520, %v527
        %530 = vrot.lane.b32.xlu0 %v496, 124
        %v531 = vpop.permute.xlu0 %530
        %532 = vrot.lane.b32.xlu0 %v497, 124
        %v533 = vpop.permute.xlu0 %532
        %v534 = vstv %s150
        %v535 = vmul.f32 %v534, %v531
        %v536 = vmul.f32 %v534, %v533
        %v537 = vadd.f32 %v528, %v535
        %v538 = vadd.f32 %v529, %v536
        %539 = vrot.lane.b32.xlu0 %v496, 123
        %v540 = vpop.permute.xlu0 %539
        %541 = vrot.lane.b32.xlu0 %v497, 123
        %v542 = vpop.permute.xlu0 %541
        %v543 = vstv %s151
        %v544 = vmul.f32 %v543, %v540
        %v545 = vmul.f32 %v543, %v542
        %v546 = vadd.f32 %v537, %v544
        %v547 = vadd.f32 %v538, %v545
        %548 = vrot.lane.b32.xlu0 %v496, 122
        %v549 = vpop.permute.xlu0 %548
        %550 = vrot.lane.b32.xlu0 %v497, 122
        %v551 = vpop.permute.xlu0 %550
        %v552 = vstv %s152
        %v553 = vmul.f32 %v552, %v549
        %v554 = vmul.f32 %v552, %v551
        %v555 = vadd.f32 %v546, %v553
        %v556 = vadd.f32 %v547, %v554
        %v557 = vld [vmem:[#allocation2 + $0x5] sm:$0xff]
        %v558 = vld [vmem:[#allocation2 + $0xd] sm:$0xff]
        %v559 = vstv %s153
        %v560 = vmul.f32 %v559, %v557
        %v561 = vmul.f32 %v559, %v558
        %v562 = vadd.f32 %v555, %v560
        %v563 = vadd.f32 %v556, %v561
        %564 = vrot.lane.b32.xlu0 %v557, 127
        %v565 = vpop.permute.xlu0 %564
        %566 = vrot.lane.b32.xlu0 %v558, 127
        %v567 = vpop.permute.xlu0 %566
        %v568 = vstv %s154
        %v569 = vmul.f32 %v568, %v565
        %v570 = vmul.f32 %v568, %v567
        %v571 = vadd.f32 %v562, %v569
        %v572 = vadd.f32 %v563, %v570
        %573 = vrot.lane.b32.xlu0 %v557, 126
        %v574 = vpop.permute.xlu0 %573
        %575 = vrot.lane.b32.xlu0 %v558, 126
        %v576 = vpop.permute.xlu0 %575
        %v577 = vstv %s155
        %v578 = vmul.f32 %v577, %v574
        %v579 = vmul.f32 %v577, %v576
        %v580 = vadd.f32 %v571, %v578
        %v581 = vadd.f32 %v572, %v579
        %582 = vrot.lane.b32.xlu0 %v557, 125
        %v583 = vpop.permute.xlu0 %582
        %584 = vrot.lane.b32.xlu0 %v558, 125
        %v585 = vpop.permute.xlu0 %584
        %v586 = vstv %s156
        %v587 = vmul.f32 %v586, %v583
        %v588 = vmul.f32 %v586, %v585
        %v589 = vadd.f32 %v580, %v587
        %v590 = vadd.f32 %v581, %v588
        %591 = vrot.lane.b32.xlu0 %v557, 124
        %v592 = vpop.permute.xlu0 %591
        %593 = vrot.lane.b32.xlu0 %v558, 124
        %v594 = vpop.permute.xlu0 %593
        %v595 = vstv %s157
        %v596 = vmul.f32 %v595, %v592
        %v597 = vmul.f32 %v595, %v594
        %v598 = vadd.f32 %v589, %v596
        %v599 = vadd.f32 %v590, %v597
        %600 = vrot.lane.b32.xlu0 %v557, 123
        %v601 = vpop.permute.xlu0 %600
        %602 = vrot.lane.b32.xlu0 %v558, 123
        %v603 = vpop.permute.xlu0 %602
        %v604 = vstv %s158
        %v605 = vmul.f32 %v604, %v601
        %v606 = vmul.f32 %v604, %v603
        %v607 = vadd.f32 %v598, %v605
        %v608 = vadd.f32 %v599, %v606
        %609 = vrot.lane.b32.xlu0 %v557, 122
        %v610 = vpop.permute.xlu0 %609
        %611 = vrot.lane.b32.xlu0 %v558, 122
        %v612 = vpop.permute.xlu0 %611
        %v613 = vstv %s159
        %v614 = vmul.f32 %v613, %v610
        %v615 = vmul.f32 %v613, %v612
        %v616 = vadd.f32 %v607, %v614
        %v617 = vadd.f32 %v608, %v615
        %v618 = vld [vmem:[#allocation2 + $0x6] sm:$0xff]
        %v619 = vld [vmem:[#allocation2 + $0xe] sm:$0xff]
        %v620 = vstv %s160
        %v621 = vmul.f32 %v620, %v618
        %v622 = vmul.f32 %v620, %v619
        %v623 = vadd.f32 %v616, %v621
        %v624 = vadd.f32 %v617, %v622
        %625 = vrot.lane.b32.xlu0 %v618, 127
        %v626 = vpop.permute.xlu0 %625
        %627 = vrot.lane.b32.xlu0 %v619, 127
        %v628 = vpop.permute.xlu0 %627
        %v629 = vstv %s161
        %v630 = vmul.f32 %v629, %v626
        %v631 = vmul.f32 %v629, %v628
        %v632 = vadd.f32 %v623, %v630
        %v633 = vadd.f32 %v624, %v631
        %634 = vrot.lane.b32.xlu0 %v618, 126
        %v635 = vpop.permute.xlu0 %634
        %636 = vrot.lane.b32.xlu0 %v619, 126
        %v637 = vpop.permute.xlu0 %636
        %v638 = vstv %s162
        %v639 = vmul.f32 %v638, %v635
        %v640 = vmul.f32 %v638, %v637
        %v641 = vadd.f32 %v632, %v639
        %v642 = vadd.f32 %v633, %v640
        %643 = vrot.lane.b32.xlu0 %v618, 125
        %v644 = vpop.permute.xlu0 %643
        %645 = vrot.lane.b32.xlu0 %v619, 125
        %v646 = vpop.permute.xlu0 %645
        %v647 = vstv %s163
        %v648 = vmul.f32 %v647, %v644
        %v649 = vmul.f32 %v647, %v646
        %v650 = vadd.f32 %v641, %v648
        %v651 = vadd.f32 %v642, %v649
        %652 = vrot.lane.b32.xlu0 %v618, 124
        %v653 = vpop.permute.xlu0 %652
        %654 = vrot.lane.b32.xlu0 %v619, 124
        %v655 = vpop.permute.xlu0 %654
        %v656 = vstv %s164
        %v657 = vmul.f32 %v656, %v653
        %v658 = vmul.f32 %v656, %v655
        %v659 = vadd.f32 %v650, %v657
        %v660 = vadd.f32 %v651, %v658
        %661 = vrot.lane.b32.xlu0 %v618, 123
        %v662 = vpop.permute.xlu0 %661
        %663 = vrot.lane.b32.xlu0 %v619, 123
        %v664 = vpop.permute.xlu0 %663
        %v665 = vstv %s165
        %v666 = vmul.f32 %v665, %v662
        %v667 = vmul.f32 %v665, %v664
        %v668 = vadd.f32 %v659, %v666
        %v669 = vadd.f32 %v660, %v667
        %670 = vrot.lane.b32.xlu0 %v618, 122
        %v671 = vpop.permute.xlu0 %670
        %672 = vrot.lane.b32.xlu0 %v619, 122
        %v673 = vpop.permute.xlu0 %672
        %v674 = vstv %s166
        %v675 = vmul.f32 %v674, %v671
        %v676 = vmul.f32 %v674, %v673
        %v677 = vadd.f32 %v668, %v675
        %v678 = vadd.f32 %v669, %v676
        %v679 = vld [vmem:[%s111] sm:$0xff]
        %v680 = vld [vmem:[%s111 + $0x8] sm:$0xff]
        %v681 = vstv %s167
        %v682 = vmul.f32 %v681, %v679
        %v683 = vmul.f32 %v681, %v680
        %v684 = vadd.f32 %v677, %v682
        %v685 = vadd.f32 %v678, %v683
        %686 = vrot.lane.b32.xlu0 %v679, 127
        %v687 = vpop.permute.xlu0 %686
        %688 = vrot.lane.b32.xlu0 %v680, 127
        %v689 = vpop.permute.xlu0 %688
        %v690 = vstv %s168
        %v691 = vmul.f32 %v690, %v687
        %v692 = vmul.f32 %v690, %v689
        %v693 = vadd.f32 %v684, %v691
        %v694 = vadd.f32 %v685, %v692
        %695 = vrot.lane.b32.xlu0 %v679, 126
        %v696 = vpop.permute.xlu0 %695
        %697 = vrot.lane.b32.xlu0 %v680, 126
        %v698 = vpop.permute.xlu0 %697
        %v699 = vstv %s169
        %v700 = vmul.f32 %v699, %v696
        %v701 = vmul.f32 %v699, %v698
        %v702 = vadd.f32 %v693, %v700
        %v703 = vadd.f32 %v694, %v701
        %704 = vrot.lane.b32.xlu0 %v679, 125
        %v705 = vpop.permute.xlu0 %704
        %706 = vrot.lane.b32.xlu0 %v680, 125
        %v707 = vpop.permute.xlu0 %706
        %v708 = vstv %s170
        %v709 = vmul.f32 %v708, %v705
        %v710 = vmul.f32 %v708, %v707
        %v711 = vadd.f32 %v702, %v709
        %v712 = vadd.f32 %v703, %v710
        %713 = vrot.lane.b32.xlu0 %v679, 124
        %v714 = vpop.permute.xlu0 %713
        %715 = vrot.lane.b32.xlu0 %v680, 124
        %v716 = vpop.permute.xlu0 %715
        %v717 = vstv %s171
        %v718 = vmul.f32 %v717, %v714
        %v719 = vmul.f32 %v717, %v716
        %v720 = vadd.f32 %v711, %v718
        %v721 = vadd.f32 %v712, %v719
        %722 = vrot.lane.b32.xlu0 %v679, 123
        %v723 = vpop.permute.xlu0 %722
        %724 = vrot.lane.b32.xlu0 %v680, 123
        %v725 = vpop.permute.xlu0 %724
        %v726 = vstv %s172
        %v727 = vmul.f32 %v726, %v723
        %v728 = vmul.f32 %v726, %v725
        %v729 = vadd.f32 %v720, %v727
        %v730 = vadd.f32 %v721, %v728
        %731 = vrot.lane.b32.xlu0 %v679, 122
        %v732 = vpop.permute.xlu0 %731
        %733 = vrot.lane.b32.xlu0 %v680, 122
        %v734 = vpop.permute.xlu0 %733
        %v735 = vstv %s173
        %v736 = vmul.f32 %v735, %v732
        %v737 = vmul.f32 %v735, %v734
        %v738 = vadd.f32 %v729, %v736
        %v739 = vadd.f32 %v730, %v737
        %v740 = vld [vmem:[%s111 + $0x1] sm:$0xff]
        %v741 = vld [vmem:[%s111 + $0x9] sm:$0xff]
        %v742 = vstv %s174
        %v743 = vmul.f32 %v742, %v740
        %v744 = vmul.f32 %v742, %v741
        %v745 = vadd.f32 %v738, %v743
        %v746 = vadd.f32 %v739, %v744
        %747 = vrot.lane.b32.xlu0 %v740, 127
        %v748 = vpop.permute.xlu0 %747
        %749 = vrot.lane.b32.xlu0 %v741, 127
        %v750 = vpop.permute.xlu0 %749
        %v751 = vstv %s175
        %v752 = vmul.f32 %v751, %v748
        %v753 = vmul.f32 %v751, %v750
        %v754 = vadd.f32 %v745, %v752
        %v755 = vadd.f32 %v746, %v753
        %756 = vrot.lane.b32.xlu0 %v740, 126
        %v757 = vpop.permute.xlu0 %756
        %758 = vrot.lane.b32.xlu0 %v741, 126
        %v759 = vpop.permute.xlu0 %758
        %v760 = vstv %s176
        %v761 = vmul.f32 %v760, %v757
        %v762 = vmul.f32 %v760, %v759
        %v763 = vadd.f32 %v754, %v761
        %v764 = vadd.f32 %v755, %v762
        %765 = vrot.lane.b32.xlu0 %v740, 125
        %v766 = vpop.permute.xlu0 %765
        %767 = vrot.lane.b32.xlu0 %v741, 125
        %v768 = vpop.permute.xlu0 %767
        %v769 = vstv %s177
        %v770 = vmul.f32 %v769, %v766
        %v771 = vmul.f32 %v769, %v768
        %v772 = vadd.f32 %v763, %v770
        %v773 = vadd.f32 %v764, %v771
        %774 = vrot.lane.b32.xlu0 %v740, 124
        %v775 = vpop.permute.xlu0 %774
        %776 = vrot.lane.b32.xlu0 %v741, 124
        %v777 = vpop.permute.xlu0 %776
        %v778 = vstv %s178
        %v779 = vmul.f32 %v778, %v775
        %v780 = vmul.f32 %v778, %v777
        %v781 = vadd.f32 %v772, %v779
        %v782 = vadd.f32 %v773, %v780
        %783 = vrot.lane.b32.xlu0 %v740, 123
        %v784 = vpop.permute.xlu0 %783
        %785 = vrot.lane.b32.xlu0 %v741, 123
        %v786 = vpop.permute.xlu0 %785
        %v787 = vstv %s179
        %v788 = vmul.f32 %v787, %v784
        %v789 = vmul.f32 %v787, %v786
        %v790 = vadd.f32 %v781, %v788
        %v791 = vadd.f32 %v782, %v789
        %792 = vrot.lane.b32.xlu0 %v740, 122
        %v793 = vpop.permute.xlu0 %792
        %794 = vrot.lane.b32.xlu0 %v741, 122
        %v795 = vpop.permute.xlu0 %794
        %v796 = vstv %s180
        %v797 = vmul.f32 %v796, %v793
        %v798 = vmul.f32 %v796, %v795
        %v799 = vadd.f32 %v790, %v797
        %v800 = vadd.f32 %v791, %v798
        %v801 = vld [vmem:[%s111 + $0x2] sm:$0xff]
        %v802 = vld [vmem:[%s111 + $0xa] sm:$0xff]
        %v803 = vstv %s181
        %v804 = vmul.f32 %v803, %v801
        %v805 = vmul.f32 %v803, %v802
        %v806 = vadd.f32 %v799, %v804
        %v807 = vadd.f32 %v800, %v805
        %808 = vrot.lane.b32.xlu0 %v801, 127
        %v809 = vpop.permute.xlu0 %808
        %810 = vrot.lane.b32.xlu0 %v802, 127
        %v811 = vpop.permute.xlu0 %810
        %v812 = vstv %s182
        %v813 = vmul.f32 %v812, %v809
        %v814 = vmul.f32 %v812, %v811
        %v815 = vadd.f32 %v806, %v813
        %v816 = vadd.f32 %v807, %v814
        %817 = vrot.lane.b32.xlu0 %v801, 126
        %v818 = vpop.permute.xlu0 %817
        %819 = vrot.lane.b32.xlu0 %v802, 126
        %v820 = vpop.permute.xlu0 %819
        %v821 = vstv %s183
        %v822 = vmul.f32 %v821, %v818
        %v823 = vmul.f32 %v821, %v820
        %v824 = vadd.f32 %v815, %v822
        %v825 = vadd.f32 %v816, %v823
        %826 = vrot.lane.b32.xlu0 %v801, 125
        %v827 = vpop.permute.xlu0 %826
        %828 = vrot.lane.b32.xlu0 %v802, 125
        %v829 = vpop.permute.xlu0 %828
        %v830 = vstv %s184
        %v831 = vmul.f32 %v830, %v827
        %v832 = vmul.f32 %v830, %v829
        %v833 = vadd.f32 %v824, %v831
        %v834 = vadd.f32 %v825, %v832
        %835 = vrot.lane.b32.xlu0 %v801, 124
        %v836 = vpop.permute.xlu0 %835
        %837 = vrot.lane.b32.xlu0 %v802, 124
        %v838 = vpop.permute.xlu0 %837
        %v839 = vstv %s185
        %v840 = vmul.f32 %v839, %v836
        %v841 = vmul.f32 %v839, %v838
        %v842 = vadd.f32 %v833, %v840
        %v843 = vadd.f32 %v834, %v841
        %844 = vrot.lane.b32.xlu0 %v801, 123
        %v845 = vpop.permute.xlu0 %844
        %846 = vrot.lane.b32.xlu0 %v802, 123
        %v847 = vpop.permute.xlu0 %846
        %v848 = vstv %s186
        %v849 = vmul.f32 %v848, %v845
        %v850 = vmul.f32 %v848, %v847
        %v851 = vadd.f32 %v842, %v849
        %v852 = vadd.f32 %v843, %v850
        %853 = vrot.lane.b32.xlu0 %v801, 122
        %v854 = vpop.permute.xlu0 %853
        %855 = vrot.lane.b32.xlu0 %v802, 122
        %v856 = vpop.permute.xlu0 %855
        %v857 = vstv %s187
        %v858 = vmul.f32 %v857, %v854
        %v859 = vmul.f32 %v857, %v856
        %v860 = vadd.f32 %v851, %v858
        %v861 = vadd.f32 %v852, %v859
        %v862 = vld [vmem:[%s111 + $0x3] sm:$0xff]
        %v863 = vld [vmem:[%s111 + $0xb] sm:$0xff]
        %v864 = vstv %s188
        %v865 = vmul.f32 %v864, %v862
        %v866 = vmul.f32 %v864, %v863
        %v867 = vadd.f32 %v860, %v865
        %v868 = vadd.f32 %v861, %v866
        %869 = vrot.lane.b32.xlu0 %v862, 127
        %v870 = vpop.permute.xlu0 %869
        %871 = vrot.lane.b32.xlu0 %v863, 127
        %v872 = vpop.permute.xlu0 %871
        %v873 = vstv %s189
        %v874 = vmul.f32 %v873, %v870
        %v875 = vmul.f32 %v873, %v872
        %v876 = vadd.f32 %v867, %v874
        %v877 = vadd.f32 %v868, %v875
        %878 = vrot.lane.b32.xlu0 %v862, 126
        %v879 = vpop.permute.xlu0 %878
        %880 = vrot.lane.b32.xlu0 %v863, 126
        %v881 = vpop.permute.xlu0 %880
        %v882 = vstv %s190
        %v883 = vmul.f32 %v882, %v879
        %v884 = vmul.f32 %v882, %v881
        %v885 = vadd.f32 %v876, %v883
        %v886 = vadd.f32 %v877, %v884
        %887 = vrot.lane.b32.xlu0 %v862, 125
        %v888 = vpop.permute.xlu0 %887
        %889 = vrot.lane.b32.xlu0 %v863, 125
        %v890 = vpop.permute.xlu0 %889
        %v891 = vstv %s191
        %v892 = vmul.f32 %v891, %v888
        %v893 = vmul.f32 %v891, %v890
        %v894 = vadd.f32 %v885, %v892
        %v895 = vadd.f32 %v886, %v893
        %896 = vrot.lane.b32.xlu0 %v862, 124
        %v897 = vpop.permute.xlu0 %896
        %898 = vrot.lane.b32.xlu0 %v863, 124
        %v899 = vpop.permute.xlu0 %898
        %v900 = vstv %s192
        %v901 = vmul.f32 %v900, %v897
        %v902 = vmul.f32 %v900, %v899
        %v903 = vadd.f32 %v894, %v901
        %v904 = vadd.f32 %v895, %v902
        %905 = vrot.lane.b32.xlu0 %v862, 123
        %v906 = vpop.permute.xlu0 %905
        %907 = vrot.lane.b32.xlu0 %v863, 123
        %v908 = vpop.permute.xlu0 %907
        %v909 = vstv %s193
        %v910 = vmul.f32 %v909, %v906
        %v911 = vmul.f32 %v909, %v908
        %v912 = vadd.f32 %v903, %v910
        %v913 = vadd.f32 %v904, %v911
        %914 = vrot.lane.b32.xlu0 %v862, 122
        %v915 = vpop.permute.xlu0 %914
        %916 = vrot.lane.b32.xlu0 %v863, 122
        %v917 = vpop.permute.xlu0 %916
        %v918 = vstv %s194
        %v919 = vmul.f32 %v918, %v915
        %v920 = vmul.f32 %v918, %v917
        %v921 = vadd.f32 %v912, %v919
        %v922 = vadd.f32 %v913, %v920
        %v923 = vld [vmem:[%s111 + $0x4] sm:$0xff]
        %v924 = vld [vmem:[%s111 + $0xc] sm:$0xff]
        %v925 = vstv %s195
        %v926 = vmul.f32 %v925, %v923
        %v927 = vmul.f32 %v925, %v924
        %v928 = vadd.f32 %v921, %v926
        %v929 = vadd.f32 %v922, %v927
        %930 = vrot.lane.b32.xlu0 %v923, 127
        %v931 = vpop.permute.xlu0 %930
        %932 = vrot.lane.b32.xlu0 %v924, 127
        %v933 = vpop.permute.xlu0 %932
        %v934 = vstv %s196
        %v935 = vmul.f32 %v934, %v931
        %v936 = vmul.f32 %v934, %v933
        %v937 = vadd.f32 %v928, %v935
        %v938 = vadd.f32 %v929, %v936
        %939 = vrot.lane.b32.xlu0 %v923, 126
        %v940 = vpop.permute.xlu0 %939
        %941 = vrot.lane.b32.xlu0 %v924, 126
        %v942 = vpop.permute.xlu0 %941
        %v943 = vstv %s197
        %v944 = vmul.f32 %v943, %v940
        %v945 = vmul.f32 %v943, %v942
        %v946 = vadd.f32 %v937, %v944
        %v947 = vadd.f32 %v938, %v945
        %948 = vrot.lane.b32.xlu0 %v923, 125
        %v949 = vpop.permute.xlu0 %948
        %950 = vrot.lane.b32.xlu0 %v924, 125
        %v951 = vpop.permute.xlu0 %950
        %v952 = vstv %s198
        %v953 = vmul.f32 %v952, %v949
        %v954 = vmul.f32 %v952, %v951
        %v955 = vadd.f32 %v946, %v953
        %v956 = vadd.f32 %v947, %v954
        %957 = vrot.lane.b32.xlu0 %v923, 124
        %v958 = vpop.permute.xlu0 %957
        %959 = vrot.lane.b32.xlu0 %v924, 124
        %v960 = vpop.permute.xlu0 %959
        %v961 = vstv %s199
        %v962 = vmul.f32 %v961, %v958
        %v963 = vmul.f32 %v961, %v960
        %v964 = vadd.f32 %v955, %v962
        %v965 = vadd.f32 %v956, %v963
        %966 = vrot.lane.b32.xlu0 %v923, 123
        %v967 = vpop.permute.xlu0 %966
        %968 = vrot.lane.b32.xlu0 %v924, 123
        %v969 = vpop.permute.xlu0 %968
        %v970 = vstv %s200
        %v971 = vmul.f32 %v970, %v967
        %v972 = vmul.f32 %v970, %v969
        %v973 = vadd.f32 %v964, %v971
        %v974 = vadd.f32 %v965, %v972
        %975 = vrot.lane.b32.xlu0 %v923, 122
        %v976 = vpop.permute.xlu0 %975
        %977 = vrot.lane.b32.xlu0 %v924, 122
        %v978 = vpop.permute.xlu0 %977
        %v979 = vstv %s201
        %v980 = vmul.f32 %v979, %v976
        %v981 = vmul.f32 %v979, %v978
        %v982 = vadd.f32 %v973, %v980
        %v983 = vadd.f32 %v974, %v981
        %v984 = vld [vmem:[%s111 + $0x5] sm:$0xff]
        %v985 = vld [vmem:[%s111 + $0xd] sm:$0xff]
        %v986 = vstv %s202
        %v987 = vmul.f32 %v986, %v984
        %v988 = vmul.f32 %v986, %v985
        %v989 = vadd.f32 %v982, %v987
        %v990 = vadd.f32 %v983, %v988
        %991 = vrot.lane.b32.xlu0 %v984, 127
        %v992 = vpop.permute.xlu0 %991
        %993 = vrot.lane.b32.xlu0 %v985, 127
        %v994 = vpop.permute.xlu0 %993
        %v995 = vstv %s203
        %v996 = vmul.f32 %v995, %v992
        %v997 = vmul.f32 %v995, %v994
        %v998 = vadd.f32 %v989, %v996
        %v999 = vadd.f32 %v990, %v997
        %1000 = vrot.lane.b32.xlu0 %v984, 126
        %v1001 = vpop.permute.xlu0 %1000
        %1002 = vrot.lane.b32.xlu0 %v985, 126
        %v1003 = vpop.permute.xlu0 %1002
        %v1004 = vstv %s204
        %v1005 = vmul.f32 %v1004, %v1001
        %v1006 = vmul.f32 %v1004, %v1003
        %v1007 = vadd.f32 %v998, %v1005
        %v1008 = vadd.f32 %v999, %v1006
        %1009 = vrot.lane.b32.xlu0 %v984, 125
        %v1010 = vpop.permute.xlu0 %1009
        %1011 = vrot.lane.b32.xlu0 %v985, 125
        %v1012 = vpop.permute.xlu0 %1011
        %v1013 = vstv %s205
        %v1014 = vmul.f32 %v1013, %v1010
        %v1015 = vmul.f32 %v1013, %v1012
        %v1016 = vadd.f32 %v1007, %v1014
        %v1017 = vadd.f32 %v1008, %v1015
        %1018 = vrot.lane.b32.xlu0 %v984, 124
        %v1019 = vpop.permute.xlu0 %1018
        %1020 = vrot.lane.b32.xlu0 %v985, 124
        %v1021 = vpop.permute.xlu0 %1020
        %v1022 = vstv %s206
        %v1023 = vmul.f32 %v1022, %v1019
        %v1024 = vmul.f32 %v1022, %v1021
        %v1025 = vadd.f32 %v1016, %v1023
        %v1026 = vadd.f32 %v1017, %v1024
        %1027 = vrot.lane.b32.xlu0 %v984, 123
        %v1028 = vpop.permute.xlu0 %1027
        %1029 = vrot.lane.b32.xlu0 %v985, 123
        %v1030 = vpop.permute.xlu0 %1029
        %v1031 = vstv %s207
        %v1032 = vmul.f32 %v1031, %v1028
        %v1033 = vmul.f32 %v1031, %v1030
        %v1034 = vadd.f32 %v1025, %v1032
        %v1035 = vadd.f32 %v1026, %v1033
        %1036 = vrot.lane.b32.xlu0 %v984, 122
        %v1037 = vpop.permute.xlu0 %1036
        %1038 = vrot.lane.b32.xlu0 %v985, 122
        %v1039 = vpop.permute.xlu0 %1038
        %v1040 = vstv %s208
        %v1041 = vmul.f32 %v1040, %v1037
        %v1042 = vmul.f32 %v1040, %v1039
        %v1043 = vadd.f32 %v1034, %v1041
        %v1044 = vadd.f32 %v1035, %v1042
        %v1045 = vld [vmem:[%s111 + $0x6] sm:$0xff]
        %v1046 = vld [vmem:[%s111 + $0xe] sm:$0xff]
        %v1047 = vstv %s209
        %v1048 = vmul.f32 %v1047, %v1045
        %v1049 = vmul.f32 %v1047, %v1046
        %v1050 = vadd.f32 %v1043, %v1048
        %v1051 = vadd.f32 %v1044, %v1049
        %1052 = vrot.lane.b32.xlu0 %v1045, 127
        %v1053 = vpop.permute.xlu0 %1052
        %1054 = vrot.lane.b32.xlu0 %v1046, 127
        %v1055 = vpop.permute.xlu0 %1054
        %v1056 = vstv %s210
        %v1057 = vmul.f32 %v1056, %v1053
        %v1058 = vmul.f32 %v1056, %v1055
        %v1059 = vadd.f32 %v1050, %v1057
        %v1060 = vadd.f32 %v1051, %v1058
        %1061 = vrot.lane.b32.xlu0 %v1045, 126
        %v1062 = vpop.permute.xlu0 %1061
        %1063 = vrot.lane.b32.xlu0 %v1046, 126
        %v1064 = vpop.permute.xlu0 %1063
        %v1065 = vstv %s211
        %v1066 = vmul.f32 %v1065, %v1062
        %v1067 = vmul.f32 %v1065, %v1064
        %v1068 = vadd.f32 %v1059, %v1066
        %v1069 = vadd.f32 %v1060, %v1067
        %1070 = vrot.lane.b32.xlu0 %v1045, 125
        %v1071 = vpop.permute.xlu0 %1070
        %1072 = vrot.lane.b32.xlu0 %v1046, 125
        %v1073 = vpop.permute.xlu0 %1072
        %v1074 = vstv %s212
        %v1075 = vmul.f32 %v1074, %v1071
        %v1076 = vmul.f32 %v1074, %v1073
        %v1077 = vadd.f32 %v1068, %v1075
        %v1078 = vadd.f32 %v1069, %v1076
        %1079 = vrot.lane.b32.xlu0 %v1045, 124
        %v1080 = vpop.permute.xlu0 %1079
        %1081 = vrot.lane.b32.xlu0 %v1046, 124
        %v1082 = vpop.permute.xlu0 %1081
        %v1083 = vstv %s213
        %v1084 = vmul.f32 %v1083, %v1080
        %v1085 = vmul.f32 %v1083, %v1082
        %v1086 = vadd.f32 %v1077, %v1084
        %v1087 = vadd.f32 %v1078, %v1085
        %1088 = vrot.lane.b32.xlu0 %v1045, 123
        %v1089 = vpop.permute.xlu0 %1088
        %1090 = vrot.lane.b32.xlu0 %v1046, 123
        %v1091 = vpop.permute.xlu0 %1090
        %v1092 = vstv %s214
        %v1093 = vmul.f32 %v1092, %v1089
        %v1094 = vmul.f32 %v1092, %v1091
        %v1095 = vadd.f32 %v1086, %v1093
        %v1096 = vadd.f32 %v1087, %v1094
        %1097 = vrot.lane.b32.xlu0 %v1045, 122
        %v1098 = vpop.permute.xlu0 %1097
        %1099 = vrot.lane.b32.xlu0 %v1046, 122
        %v1100 = vpop.permute.xlu0 %1099
        %v1101 = vstv %s215
        %v1102 = vmul.f32 %v1101, %v1098
        %v1103 = vmul.f32 %v1101, %v1100
        %v1104 = vadd.f32 %v1095, %v1102
        %v1105 = vadd.f32 %v1096, %v1103
        %v1106 = vsub.f32 0.0, %v1104
        %v1107 = vsub.f32 0.0, %v1105
        %v1108 = vmul.f32 %v1106, 1.442695
        %v1109 = vpow.pop %v1108
        %v1110 = vmul.f32 %v1107, 1.442695
        %v1111 = vpow.pop %v1110
        %v1112 = vadd.f32 %v1109, 1.0
        %v1113 = vadd.f32 %v1111, 1.0
        %v1114 = vrcp.pop %v1112
        %v1115 = vmul.f32 1.0, %v1114
        %v1116 = vrcp.pop %v1113
        %v1117 = vmul.f32 1.0, %v1116
        %s1118 = scalar_lea.vmem [#allocation10], %s222
        %1119 = vst [vmem:[%s1118] sm:$0xff] %v1115
        %1120 = vst [vmem:[%s1118 + $0x8] sm:$0xff] %v1117
      $region37: #{tpu_custom_call.1} parent=31 // loop_footer
        %s221 = sadd.s32 1, %s217
      $region38: #{tpu_custom_call.1} parent=31 // loop_footer_branch
        %216 = sbr.rel target = $region34
      $region39: #{tpu_custom_call.1} parent=31 // loop_exit
        _
    $region32: #{tpu_custom_call.1} parent=1 // pred_fallthru
      _
    // Predicated region
    $region40: #{tpu_custom_call.1} parent=1 // pred_check
      _
    $region41: #{tpu_custom_call.1} parent=1 // pred_check_branch
      %1122 = sbr.rel (0) target = $region43
    $region42: #{tpu_custom_call.1} parent=1 // pred_region
      %s1124 = ssub.s32 512, 512
      %1125 = vsyncadd [#allocation7], %s1124
      %s1126 = sshll.u32 [#allocation10], 4
      %s1127 = int_to_ptr.vmem [resolvable:$true] %s1126
      %1132 = dma.vmem_to_hbm [thread:$0]  %s1127, 512, %s2, [#allocation7], 128, 128, 8
    $region43: #{tpu_custom_call.1} parent=1 // pred_fallthru
      _
    // Predicated region
    $region44: #{tpu_custom_call.1} parent=1 // pred_check
      _
    $region45: #{tpu_custom_call.1} parent=1 // pred_check_branch
      %1134 = sbr.rel (0) target = $region47
    $region46: #{tpu_custom_call.1} parent=1 // pred_region
      %1135 = dma.done [#allocation7], 512
    $region47: #{tpu_custom_call.1} parent=1 // pred_fallthru
      _
    %1136 = vsyncpa [#allocation6], 1
    %1137 = vsyncpa [#allocation7], 1
    %1138 = vsyncpa [#allocation8], 1

</llo_original>
